<compile_context>
chip_gen: v5e
topology: v5e:2x2
jax: 0.10.0
libtpu: 0.0.40
codegen_flags: <defaults>
</compile_context>

<pallas_src>
import math
from functools import partial

import jax
import jax.numpy as jnp
from jax import lax
from jax.experimental import pallas as pl
from jax.experimental.pallas import tpu as pltpu


def mhsa_kernel(x_ref, wqkv_ref, bqkv_ref, wp_ref, bp_ref, o_ref, *, num_heads):
    # x_ref block: (1, N, E)
    x = x_ref[0].astype(jnp.bfloat16)                       # (N, E) bf16 operand
    N, E = x.shape
    Dh = E // num_heads
    scale = 1.0 / math.sqrt(Dh)

    # Fused QKV projection: one wide (N, 3E) MXU matmul, f32 accumulation + bias.
    qkv = jnp.dot(x, wqkv_ref[...],
                  preferred_element_type=jnp.float32) + bqkv_ref[...]   # (N, 3E) f32

    # E-aligned lane slices; score scale folded once into q (N*E muls, not H*N^2).
    q = (qkv[:, :E] * scale).astype(jnp.bfloat16)
    k = qkv[:, E:2 * E].astype(jnp.bfloat16)
    v = qkv[:, 2 * E:].astype(jnp.bfloat16)

    wp = wp_ref[...]                                        # (E, E) bf16

    # Per-head attention with the output projection fused into an f32 accumulator.
    acc = None
    for h in range(num_heads):                              # static, small H
        sl = slice(h * Dh, (h + 1) * Dh)
        qh, kh, vh = q[:, sl], k[:, sl], v[:, sl]

        # scores: contract last dim of both operands (no explicit transpose of k)
        s = lax.dot_general(qh, kh, (((1,), (1,)), ((), ())),
                            preferred_element_type=jnp.float32)          # (N, N) f32
        s = s - jnp.max(s, axis=-1, keepdims=True)
        p = jnp.exp(s)                                                    # f32 softmax
        inv = pl.reciprocal(jnp.sum(p, axis=-1, keepdims=True), approx=True)

        oh = jnp.dot(p.astype(jnp.bfloat16), vh,
                     preferred_element_type=jnp.float32) * inv            # (N, Dh) f32

        # fused output projection for this head: (N, Dh) @ (Dh, E) -> (N, E)
        contrib = jnp.dot(oh.astype(jnp.bfloat16), wp[sl, :],
                          preferred_element_type=jnp.float32)
        acc = contrib if acc is None else acc + contrib

    # add output-projection bias once; lane-dense (N, E) store
    o_ref[0] = (acc + bp_ref[...]).astype(o_ref.dtype)


def multi_head_self_attention(x, W_qkv, b_qkv, W_proj, b_proj, num_heads):
    """x: (B, N, E); W_qkv: (3E, E); b_qkv: (3E,); W_proj: (E, E); b_proj: (E,)."""
    B, N, E = x.shape
    H = num_heads
    Dh = E // H

    # PyTorch rearrange 'b n (h d qkv) -> qkv b h n d' means the qkv_proj output
    # column index = h*Dh*3 + d*3 + s (s in {q,k,v}). Re-pack into one fused
    # (E_in, 3E_out) weight whose output columns are [Q(h,d) | K(h,d) | V(h,d)].
    W3 = W_qkv.reshape(H, Dh, 3, E)                         # rows viewed as (h, d, s)
    b3 = b_qkv.reshape(H, Dh, 3)
    Wq = W3[:, :, 0, :].reshape(E, E)                       # (out, in)
    Wk = W3[:, :, 1, :].reshape(E, E)
    Wv = W3[:, :, 2, :].reshape(E, E)
    W_qkv_T = jnp.concatenate([Wq, Wk, Wv], axis=0).T.astype(jnp.bfloat16)  # (E, 3E)
    b_fused = jnp.concatenate([b3[:, :, 0].reshape(E),
                               b3[:, :, 1].reshape(E),
                               b3[:, :, 2].reshape(E)]).reshape(1, 3 * E)   # f32

    WpT = W_proj.T.astype(jnp.bfloat16)                     # (E, E)
    bp = b_proj.reshape(1, E)                               # f32

    # Constant-index-map full blocks for weights/biases (fetched once; small at
    # these shapes — for very large E, single-buffer them to save VMEM).
    const2d = lambda shp: pl.BlockSpec(shp, lambda b: (0, 0))

    return pl.pallas_call(
        partial(mhsa_kernel, num_heads=H),
        out_shape=jax.ShapeDtypeStruct((B, N, E), x.dtype),
        grid_spec=pltpu.PrefetchScalarGridSpec(
            num_scalar_prefetch=0,
            grid=(B,),
            in_specs=[
                pl.BlockSpec((1, N, E), lambda b: (b, 0, 0)),   # x
                const2d((E, 3 * E)),                            # fused QKV weight (bf16)
                const2d((1, 3 * E)),                            # fused QKV bias  (f32)
                const2d((E, E)),                                # proj weight^T   (bf16)
                const2d((1, E)),                                # proj bias       (f32)
            ],
            out_specs=pl.BlockSpec((1, N, E), lambda b: (b, 0, 0)),
        ),
        compiler_params=pltpu.CompilerParams(
            dimension_semantics=("parallel",)),
    )(x, W_qkv_T, b_fused, WpT, bp)


def reference(x, W_qkv, b_qkv, W_proj, b_proj, num_heads):
    """Pure-JAX (f32) replica of the PyTorch forward (dropout = identity)."""
    B, N, E = x.shape
    H = num_heads
    Dh = E // H
    qkv = x @ W_qkv.T + b_qkv                              # (B, N, 3E)
    qkv = qkv.reshape(B, N, H, Dh, 3)
    qkv = jnp.transpose(qkv, (4, 0, 2, 1, 3))              # (3, B, H, N, Dh)
    q, k, v = qkv[0], qkv[1], qkv[2]
    att = jnp.einsum('bhqd,bhkd->bhqk', q, k) / math.sqrt(Dh)
    att = jax.nn.softmax(att, axis=-1)
    out = jnp.einsum('bhqk,bhkd->bhqd', att, v)
    out = jnp.transpose(out, (0, 2, 1, 3)).reshape(B, N, E)
    return out @ W_proj.T + b_proj


if __name__ == "__main__":
    # Lane/sublane-dense small shapes: E multiple of 128, N multiple of 8,
    # B >= 2 so the 'parallel' batch axis feeds both TCs on v7x.
    B, N, E, H = 2, 128, 128, 4
    key = jax.random.PRNGKey(0)
    kx, kw1, kb1, kw2, kb2 = jax.random.split(key, 5)

    x = jax.random.normal(kx, (B, N, E), dtype=jnp.float32)
    bound1 = 1.0 / math.sqrt(E)
    W_qkv = jax.random.uniform(kw1, (3 * E, E), jnp.float32, -bound1, bound1)
    b_qkv = jax.random.uniform(kb1, (3 * E,), jnp.float32, -bound1, bound1)
    W_proj = jax.random.uniform(kw2, (E, E), jnp.float32, -bound1, bound1)
    b_proj = jax.random.uniform(kb2, (E,), jnp.float32, -bound1, bound1)

    out = multi_head_self_attention(x, W_qkv, b_qkv, W_proj, b_proj, H)
    out = jax.block_until_ready(out)

    ref = reference(x, W_qkv, b_qkv, W_proj, b_proj, H)
    assert out.shape == (B, N, E)
    # bf16 matmul operands (f32 accumulation) + approx reciprocal -> looser tolerance
    assert jnp.allclose(out, ref, atol=5e-2, rtol=5e-2), \
        f"max err {jnp.max(jnp.abs(out - ref))}"
    print("KERNEL_OK")
</pallas_src>

<mosaic_0001>
module attributes {stable_mosaic.version = 11 : i64} {
  func.func @mhsa_kernel(%arg0: i32, %arg1: memref<1x128x128xf32, #tpu.memory_space<vmem>>, %arg2: memref<128x384xbf16, #tpu.memory_space<vmem>>, %arg3: memref<1x384xf32, #tpu.memory_space<vmem>>, %arg4: memref<128x128xbf16, #tpu.memory_space<vmem>>, %arg5: memref<1x128xf32, #tpu.memory_space<vmem>>, %arg6: memref<1x128x128xf32, #tpu.memory_space<vmem>>) attributes {dimension_semantics = [#tpu.dimension_semantics<parallel>], iteration_bounds = array<i64: 2>, scalar_prefetch = 0 : i64, scratch_operands = 0 : i64, tpu.core_type = #tpu.core_type<tc>, window_params = [{transform_indices = @transform_0, window_bounds = array<i64: 1, 128, 128>}, {pipeline_mode = #tpu.pipeline_mode<synchronous>, transform_indices = @transform_1, window_bounds = array<i64: 128, 384>}, {pipeline_mode = #tpu.pipeline_mode<synchronous>, transform_indices = @transform_2, window_bounds = array<i64: 1, 384>}, {pipeline_mode = #tpu.pipeline_mode<synchronous>, transform_indices = @transform_3, window_bounds = array<i64: 128, 128>}, {pipeline_mode = #tpu.pipeline_mode<synchronous>, transform_indices = @transform_4, window_bounds = array<i64: 1, 128>}, {transform_indices = @transform_5, window_bounds = array<i64: 1, 128, 128>}]} {
    %c0 = arith.constant 0 : index
    %c0_0 = arith.constant 0 : index
    %c0_1 = arith.constant 0 : index
    %0 = vector.load %arg1[%c0, %c0_0, %c0_1] : memref<1x128x128xf32, #tpu.memory_space<vmem>>, vector<1x128x128xf32>
    %1 = vector.shape_cast %0 : vector<1x128x128xf32> to vector<128x128xf32>
    %2 = arith.truncf %1 : vector<128x128xf32> to vector<128x128xbf16>
    %c0_2 = arith.constant 0 : index
    %c0_3 = arith.constant 0 : index
    %3 = vector.load %arg2[%c0_2, %c0_3] : memref<128x384xbf16, #tpu.memory_space<vmem>>, vector<128x384xbf16>
    %cst = arith.constant dense<0.000000e+00> : vector<128x384xf32>
    %4 = tpu.matmul %2, %3, %cst {dimension_numbers = #tpu.dot_dimension_numbers<[1], [0], [0], [1], [0, 0, 1, 1], [], []>} : vector<128x128xbf16>, vector<128x384xbf16>, vector<128x384xf32> -> vector<128x384xf32>
    %c0_4 = arith.constant 0 : index
    %c0_5 = arith.constant 0 : index
    %5 = vector.load %arg3[%c0_4, %c0_5] : memref<1x384xf32, #tpu.memory_space<vmem>>, vector<1x384xf32>
    %6 = vector.broadcast %5 : vector<1x384xf32> to vector<128x384xf32>
    %7 = arith.addf %4, %6 : vector<128x384xf32>
    %8 = vector.extract_strided_slice %7 {offsets = [0, 0], sizes = [128, 128], strides = [1, 1]} : vector<128x384xf32> to vector<128x128xf32>
    %cst_6 = arith.constant 0.176776692 : f32
    %9 = vector.broadcast %cst_6 : f32 to vector<128x128xf32>
    %10 = arith.mulf %8, %9 : vector<128x128xf32>
    %11 = arith.truncf %10 : vector<128x128xf32> to vector<128x128xbf16>
    %12 = vector.extract_strided_slice %7 {offsets = [0, 128], sizes = [128, 128], strides = [1, 1]} : vector<128x384xf32> to vector<128x128xf32>
    %13 = arith.truncf %12 : vector<128x128xf32> to vector<128x128xbf16>
    %14 = vector.extract_strided_slice %7 {offsets = [0, 256], sizes = [128, 128], strides = [1, 1]} : vector<128x384xf32> to vector<128x128xf32>
    %15 = arith.truncf %14 : vector<128x128xf32> to vector<128x128xbf16>
    %c0_7 = arith.constant 0 : index
    %c0_8 = arith.constant 0 : index
    %16 = vector.load %arg4[%c0_7, %c0_8] : memref<128x128xbf16, #tpu.memory_space<vmem>>, vector<128x128xbf16>
    %17 = vector.extract_strided_slice %11 {offsets = [0, 0], sizes = [128, 32], strides = [1, 1]} : vector<128x128xbf16> to vector<128x32xbf16>
    %18 = vector.extract_strided_slice %13 {offsets = [0, 0], sizes = [128, 32], strides = [1, 1]} : vector<128x128xbf16> to vector<128x32xbf16>
    %19 = vector.extract_strided_slice %15 {offsets = [0, 0], sizes = [128, 32], strides = [1, 1]} : vector<128x128xbf16> to vector<128x32xbf16>
    %cst_9 = arith.constant dense<0.000000e+00> : vector<128x128xf32>
    %20 = tpu.matmul %17, %18, %cst_9 {dimension_numbers = #tpu.dot_dimension_numbers<[1], [1], [0], [0], [0, 0, 1, 0], [], []>} : vector<128x32xbf16>, vector<128x32xbf16>, vector<128x128xf32> -> vector<128x128xf32>
    %cst_10 = arith.constant dense<0xFF800000> : vector<128xf32>
    %21 = vector.multi_reduction <maximumf>, %20, %cst_10 [1] : vector<128x128xf32> to vector<128xf32>
    %22 = vector.shape_cast %21 : vector<128xf32> to vector<128x1xf32>
    %23 = vector.broadcast %22 : vector<128x1xf32> to vector<128x128xf32>
    %24 = arith.subf %20, %23 : vector<128x128xf32>
    %25 = math.exp %24 : vector<128x128xf32>
    %cst_11 = arith.constant dense<0.000000e+00> : vector<128xf32>
    %26 = vector.multi_reduction <add>, %25, %cst_11 [1] : vector<128x128xf32> to vector<128xf32>
    %27 = vector.shape_cast %26 : vector<128xf32> to vector<128x1xf32>
    %28 = tpu.reciprocal %27 {approx = true} : vector<128x1xf32> -> vector<128x1xf32>
    %29 = arith.truncf %25 : vector<128x128xf32> to vector<128x128xbf16>
    %cst_12 = arith.constant dense<0.000000e+00> : vector<128x32xf32>
    %30 = tpu.matmul %29, %19, %cst_12 {dimension_numbers = #tpu.dot_dimension_numbers<[1], [0], [0], [1], [0, 0, 1, 1], [], []>} : vector<128x128xbf16>, vector<128x32xbf16>, vector<128x32xf32> -> vector<128x32xf32>
    %31 = vector.broadcast %28 : vector<128x1xf32> to vector<128x32xf32>
    %32 = arith.mulf %30, %31 : vector<128x32xf32>
    %33 = arith.truncf %32 : vector<128x32xf32> to vector<128x32xbf16>
    %34 = vector.extract_strided_slice %16 {offsets = [0, 0], sizes = [32, 128], strides = [1, 1]} : vector<128x128xbf16> to vector<32x128xbf16>
    %cst_13 = arith.constant dense<0.000000e+00> : vector<128x128xf32>
    %35 = tpu.matmul %33, %34, %cst_13 {dimension_numbers = #tpu.dot_dimension_numbers<[1], [0], [0], [1], [0, 0, 1, 1], [], []>} : vector<128x32xbf16>, vector<32x128xbf16>, vector<128x128xf32> -> vector<128x128xf32>
    %36 = vector.extract_strided_slice %11 {offsets = [0, 32], sizes = [128, 32], strides = [1, 1]} : vector<128x128xbf16> to vector<128x32xbf16>
    %37 = vector.extract_strided_slice %13 {offsets = [0, 32], sizes = [128, 32], strides = [1, 1]} : vector<128x128xbf16> to vector<128x32xbf16>
    %38 = vector.extract_strided_slice %15 {offsets = [0, 32], sizes = [128, 32], strides = [1, 1]} : vector<128x128xbf16> to vector<128x32xbf16>
    %cst_14 = arith.constant dense<0.000000e+00> : vector<128x128xf32>
    %39 = tpu.matmul %36, %37, %cst_14 {dimension_numbers = #tpu.dot_dimension_numbers<[1], [1], [0], [0], [0, 0, 1, 0], [], []>} : vector<128x32xbf16>, vector<128x32xbf16>, vector<128x128xf32> -> vector<128x128xf32>
    %cst_15 = arith.constant dense<0xFF800000> : vector<128xf32>
    %40 = vector.multi_reduction <maximumf>, %39, %cst_15 [1] : vector<128x128xf32> to vector<128xf32>
    %41 = vector.shape_cast %40 : vector<128xf32> to vector<128x1xf32>
    %42 = vector.broadcast %41 : vector<128x1xf32> to vector<128x128xf32>
    %43 = arith.subf %39, %42 : vector<128x128xf32>
    %44 = math.exp %43 : vector<128x128xf32>
    %cst_16 = arith.constant dense<0.000000e+00> : vector<128xf32>
    %45 = vector.multi_reduction <add>, %44, %cst_16 [1] : vector<128x128xf32> to vector<128xf32>
    %46 = vector.shape_cast %45 : vector<128xf32> to vector<128x1xf32>
    %47 = tpu.reciprocal %46 {approx = true} : vector<128x1xf32> -> vector<128x1xf32>
    %48 = arith.truncf %44 : vector<128x128xf32> to vector<128x128xbf16>
    %cst_17 = arith.constant dense<0.000000e+00> : vector<128x32xf32>
    %49 = tpu.matmul %48, %38, %cst_17 {dimension_numbers = #tpu.dot_dimension_numbers<[1], [0], [0], [1], [0, 0, 1, 1], [], []>} : vector<128x128xbf16>, vector<128x32xbf16>, vector<128x32xf32> -> vector<128x32xf32>
    %50 = vector.broadcast %47 : vector<128x1xf32> to vector<128x32xf32>
    %51 = arith.mulf %49, %50 : vector<128x32xf32>
    %52 = arith.truncf %51 : vector<128x32xf32> to vector<128x32xbf16>
    %53 = vector.extract_strided_slice %16 {offsets = [32, 0], sizes = [32, 128], strides = [1, 1]} : vector<128x128xbf16> to vector<32x128xbf16>
    %cst_18 = arith.constant dense<0.000000e+00> : vector<128x128xf32>
    %54 = tpu.matmul %52, %53, %cst_18 {dimension_numbers = #tpu.dot_dimension_numbers<[1], [0], [0], [1], [0, 0, 1, 1], [], []>} : vector<128x32xbf16>, vector<32x128xbf16>, vector<128x128xf32> -> vector<128x128xf32>
    %55 = arith.addf %35, %54 : vector<128x128xf32>
    %56 = vector.extract_strided_slice %11 {offsets = [0, 64], sizes = [128, 32], strides = [1, 1]} : vector<128x128xbf16> to vector<128x32xbf16>
    %57 = vector.extract_strided_slice %13 {offsets = [0, 64], sizes = [128, 32], strides = [1, 1]} : vector<128x128xbf16> to vector<128x32xbf16>
    %58 = vector.extract_strided_slice %15 {offsets = [0, 64], sizes = [128, 32], strides = [1, 1]} : vector<128x128xbf16> to vector<128x32xbf16>
    %cst_19 = arith.constant dense<0.000000e+00> : vector<128x128xf32>
    %59 = tpu.matmul %56, %57, %cst_19 {dimension_numbers = #tpu.dot_dimension_numbers<[1], [1], [0], [0], [0, 0, 1, 0], [], []>} : vector<128x32xbf16>, vector<128x32xbf16>, vector<128x128xf32> -> vector<128x128xf32>
    %cst_20 = arith.constant dense<0xFF800000> : vector<128xf32>
    %60 = vector.multi_reduction <maximumf>, %59, %cst_20 [1] : vector<128x128xf32> to vector<128xf32>
    %61 = vector.shape_cast %60 : vector<128xf32> to vector<128x1xf32>
    %62 = vector.broadcast %61 : vector<128x1xf32> to vector<128x128xf32>
    %63 = arith.subf %59, %62 : vector<128x128xf32>
    %64 = math.exp %63 : vector<128x128xf32>
    %cst_21 = arith.constant dense<0.000000e+00> : vector<128xf32>
    %65 = vector.multi_reduction <add>, %64, %cst_21 [1] : vector<128x128xf32> to vector<128xf32>
    %66 = vector.shape_cast %65 : vector<128xf32> to vector<128x1xf32>
    %67 = tpu.reciprocal %66 {approx = true} : vector<128x1xf32> -> vector<128x1xf32>
    %68 = arith.truncf %64 : vector<128x128xf32> to vector<128x128xbf16>
    %cst_22 = arith.constant dense<0.000000e+00> : vector<128x32xf32>
    %69 = tpu.matmul %68, %58, %cst_22 {dimension_numbers = #tpu.dot_dimension_numbers<[1], [0], [0], [1], [0, 0, 1, 1], [], []>} : vector<128x128xbf16>, vector<128x32xbf16>, vector<128x32xf32> -> vector<128x32xf32>
    %70 = vector.broadcast %67 : vector<128x1xf32> to vector<128x32xf32>
    %71 = arith.mulf %69, %70 : vector<128x32xf32>
    %72 = arith.truncf %71 : vector<128x32xf32> to vector<128x32xbf16>
    %73 = vector.extract_strided_slice %16 {offsets = [64, 0], sizes = [32, 128], strides = [1, 1]} : vector<128x128xbf16> to vector<32x128xbf16>
    %cst_23 = arith.constant dense<0.000000e+00> : vector<128x128xf32>
    %74 = tpu.matmul %72, %73, %cst_23 {dimension_numbers = #tpu.dot_dimension_numbers<[1], [0], [0], [1], [0, 0, 1, 1], [], []>} : vector<128x32xbf16>, vector<32x128xbf16>, vector<128x128xf32> -> vector<128x128xf32>
    %75 = arith.addf %55, %74 : vector<128x128xf32>
    %76 = vector.extract_strided_slice %11 {offsets = [0, 96], sizes = [128, 32], strides = [1, 1]} : vector<128x128xbf16> to vector<128x32xbf16>
    %77 = vector.extract_strided_slice %13 {offsets = [0, 96], sizes = [128, 32], strides = [1, 1]} : vector<128x128xbf16> to vector<128x32xbf16>
    %78 = vector.extract_strided_slice %15 {offsets = [0, 96], sizes = [128, 32], strides = [1, 1]} : vector<128x128xbf16> to vector<128x32xbf16>
    %cst_24 = arith.constant dense<0.000000e+00> : vector<128x128xf32>
    %79 = tpu.matmul %76, %77, %cst_24 {dimension_numbers = #tpu.dot_dimension_numbers<[1], [1], [0], [0], [0, 0, 1, 0], [], []>} : vector<128x32xbf16>, vector<128x32xbf16>, vector<128x128xf32> -> vector<128x128xf32>
    %cst_25 = arith.constant dense<0xFF800000> : vector<128xf32>
    %80 = vector.multi_reduction <maximumf>, %79, %cst_25 [1] : vector<128x128xf32> to vector<128xf32>
    %81 = vector.shape_cast %80 : vector<128xf32> to vector<128x1xf32>
    %82 = vector.broadcast %81 : vector<128x1xf32> to vector<128x128xf32>
    %83 = arith.subf %79, %82 : vector<128x128xf32>
    %84 = math.exp %83 : vector<128x128xf32>
    %cst_26 = arith.constant dense<0.000000e+00> : vector<128xf32>
    %85 = vector.multi_reduction <add>, %84, %cst_26 [1] : vector<128x128xf32> to vector<128xf32>
    %86 = vector.shape_cast %85 : vector<128xf32> to vector<128x1xf32>
    %87 = tpu.reciprocal %86 {approx = true} : vector<128x1xf32> -> vector<128x1xf32>
    %88 = arith.truncf %84 : vector<128x128xf32> to vector<128x128xbf16>
    %cst_27 = arith.constant dense<0.000000e+00> : vector<128x32xf32>
    %89 = tpu.matmul %88, %78, %cst_27 {dimension_numbers = #tpu.dot_dimension_numbers<[1], [0], [0], [1], [0, 0, 1, 1], [], []>} : vector<128x128xbf16>, vector<128x32xbf16>, vector<128x32xf32> -> vector<128x32xf32>
    %90 = vector.broadcast %87 : vector<128x1xf32> to vector<128x32xf32>
    %91 = arith.mulf %89, %90 : vector<128x32xf32>
    %92 = arith.truncf %91 : vector<128x32xf32> to vector<128x32xbf16>
    %93 = vector.extract_strided_slice %16 {offsets = [96, 0], sizes = [32, 128], strides = [1, 1]} : vector<128x128xbf16> to vector<32x128xbf16>
    %cst_28 = arith.constant dense<0.000000e+00> : vector<128x128xf32>
    %94 = tpu.matmul %92, %93, %cst_28 {dimension_numbers = #tpu.dot_dimension_numbers<[1], [0], [0], [1], [0, 0, 1, 1], [], []>} : vector<128x32xbf16>, vector<32x128xbf16>, vector<128x128xf32> -> vector<128x128xf32>
    %95 = arith.addf %75, %94 : vector<128x128xf32>
    %c0_29 = arith.constant 0 : index
    %c0_30 = arith.constant 0 : index
    %96 = vector.load %arg5[%c0_29, %c0_30] : memref<1x128xf32, #tpu.memory_space<vmem>>, vector<1x128xf32>
    %97 = vector.broadcast %96 : vector<1x128xf32> to vector<128x128xf32>
    %98 = arith.addf %95, %97 : vector<128x128xf32>
    %c0_31 = arith.constant 0 : index
    %c0_32 = arith.constant 0 : index
    %c0_33 = arith.constant 0 : index
    %99 = vector.load %arg6[%c0_31, %c0_32, %c0_33] : memref<1x128x128xf32, #tpu.memory_space<vmem>>, vector<1x128x128xf32>
    %100 = vector.shape_cast %99 : vector<1x128x128xf32> to vector<128x128xf32>
    %101 = vector.shape_cast %98 : vector<128x128xf32> to vector<1x128x128xf32>
    tpu.vector_store %arg6[%c0_31, %c0_32, %c0_33], %101 {strides = array<i32>} : memref<1x128x128xf32, #tpu.memory_space<vmem>>, vector<1x128x128xf32>,
    return
  }
  func.func @transform_0(%arg0: i32) -> (i32, i32, i32) {
    %c0_i32 = arith.constant 0 : i32
    %c0_i32_0 = arith.constant 0 : i32
    %c0_i32_1 = arith.constant 0 : i32
    return %arg0, %c0_i32, %c0_i32_0 : i32, i32, i32
  }
  func.func @transform_1(%arg0: i32) -> (i32, i32) {
    %c0_i32 = arith.constant 0 : i32
    %c0_i32_0 = arith.constant 0 : i32
    %c0_i32_1 = arith.constant 0 : i32
    return %c0_i32, %c0_i32_0 : i32, i32
  }
  func.func @transform_2(%arg0: i32) -> (i32, i32) {
    %c0_i32 = arith.constant 0 : i32
    %c0_i32_0 = arith.constant 0 : i32
    %c0_i32_1 = arith.constant 0 : i32
    return %c0_i32, %c0_i32_0 : i32, i32
  }
  func.func @transform_3(%arg0: i32) -> (i32, i32) {
    %c0_i32 = arith.constant 0 : i32
    %c0_i32_0 = arith.constant 0 : i32
    %c0_i32_1 = arith.constant 0 : i32
    return %c0_i32, %c0_i32_0 : i32, i32
  }
  func.func @transform_4(%arg0: i32) -> (i32, i32) {
    %c0_i32 = arith.constant 0 : i32
    %c0_i32_0 = arith.constant 0 : i32
    %c0_i32_1 = arith.constant 0 : i32
    return %c0_i32, %c0_i32_0 : i32, i32
  }
  func.func @transform_5(%arg0: i32) -> (i32, i32, i32) {
    %c0_i32 = arith.constant 0 : i32
    %c0_i32_0 = arith.constant 0 : i32
    %c0_i32_1 = arith.constant 0 : i32
    return %arg0, %c0_i32, %c0_i32_0 : i32, i32, i32
  }
}

</mosaic_0001>

<llo_original>
// kernel: tpu_custom_call.1
$region0: #{tpu_custom_call.1}
  #allocation0 [shape = 'u32[]', space=smem, size = 0x4, offset = 0x4, fixed_abs, tag = 'smem constant byte address 0x4 - core index']
  #allocation1 [shape = 'u32[72,128]{1,0:T(1,128)}', space=vmem, size = 0x9000, scoped, tag = 'internal scratch']
  %s0 = inlined_call_operand.hbm [shape: f32[2,128,128], index: 0, kind: input, shape index: {}]
  %s1 = inlined_call_operand.hbm [shape: bf16[128,384], index: 1, kind: input, shape index: {}]
  %s2 = inlined_call_operand.hbm [shape: f32[1,384], index: 2, kind: input, shape index: {}]
  %s3 = inlined_call_operand.hbm [shape: bf16[128,128], index: 3, kind: input, shape index: {}]
  %s4 = inlined_call_operand.vmem [shape: f32[1,128], index: 4, kind: input, shape index: {}]
  %s5 = inlined_call_operand.hbm [shape: f32[2,128,128], index: 5, kind: output, shape index: {}]
  %s6 = sld [smem:[#allocation0]]
  $region69: #{tpu_custom_call.1} parent=0
    _
  %s8 = ssub.s32 1, %s6
  %s9 = scalar_select 0, %s8, %s6
  $region1: #{tpu_custom_call.1} parent=0
    #allocation2 [shape = 'u8[131072]{0}', space=vmem, size = 0x20000, scoped, tag = 'input window, operand 0']
    #allocation3 [shape = 's32[2]{0}', space=sflag, size = 0x8, scoped, tag = 'scoped memory for tpu_custom_call.1']
    #allocation4 [shape = 's32[2]{0}', space=sflag, size = 0x8, scoped, tag = 'scoped memory for tpu_custom_call.1']
    #allocation5 [shape = 'u8[98304]{0}', space=vmem, size = 0x18000, scoped, tag = 'input window, operand 1, single buffered']
    #allocation6 [shape = 's32[1]{0}', space=sflag, size = 0x4, scoped, tag = 'scoped memory for tpu_custom_call.1']
    #allocation7 [shape = 'u8[1536]{0}', space=vmem, size = 0x800, scoped, tag = 'input window, operand 2, single buffered']
    #allocation8 [shape = 'u8[32768]{0}', space=vmem, size = 0x8000, scoped, tag = 'input window, operand 3, single buffered']
    #allocation9 [shape = 's32[1]{0}', space=sflag, size = 0x4, scoped, tag = 'scoped memory for tpu_custom_call.1']
    #allocation10 [shape = 'u8[131072]{0}', space=vmem, size = 0x20000, scoped, tag = 'output window, operand 0']
    %10 = vsyncpa [#allocation3], 0
    %s11 = scalar_lea.sflag [#allocation3], 1
    %12 = vsyncpa %s11, 0
    %13 = vsyncpa [#allocation6], 0
    %14 = vsyncpa [#allocation9], 0
    %15 = vsyncpa [#allocation4], 0
    %s16 = scalar_lea.sflag [#allocation4], 1
    %17 = vsyncpa %s16, 0
    loop: start=0, step=1, limit=4
    $region2: #{tpu_custom_call.1} parent=1 // loop_pre_header
      _
    $region3: #{tpu_custom_call.1} parent=1 // loop_header
      %s19 = sphi 0, %s23
      %p20 = scmp.ge.s32.totalorder %s19, 4
      %s29 = sphi 0, %s31
      %s32 = sphi 0, %s29
      %s33 = sphi 0, %s32
      %s49 = sphi 0, %s33
      %s53 = sphi 0, %s53
      %s55 = sphi 0, %s53
      %s56 = sphi 0, %s55
      %s70 = sphi 0, %s56
      %s74 = sphi 0, %s74
      %s76 = sphi 0, %s74
      %s77 = sphi 0, %s76
      %s91 = sphi 0, %s77
      %s95 = sphi 0, %s95
      %s97 = sphi 0, %s95
      %s98 = sphi 0, %s97
      %s112 = sphi 0, %s98
      %s116 = sphi 0, %s116
      %s118 = sphi 0, %s116
      %s119 = sphi 0, %s118
      %s133 = sphi 0, %s119
      %s139 = sphi 0, %s141
      %s142 = sphi 0, %s139
      %s143 = sphi 0, %s142
      %s159 = sphi 0, %s143
    $region4: #{tpu_custom_call.1} parent=1 // loop_header_branch
      %22 = sbr.rel (%p20) target = $region8
    $region5: #{tpu_custom_call.1} parent=1 // loop_body
      %s24 = ssub.s32 %s19, 1
      %s25 = ssub.s32 %s19, 2
      %s26 = sadd.s32 %s19, 1
      %s27 = ssub.s32 %s19, %s26
      %p28 = scmp.eq.s32.totalorder %s27, 0
      %s30 = sadd.s32 %s29, 1
      %s31 = scalar_select %p28, %s29, %s30
      %p34 = pneg %p28
      %p35 = scmp.eq.s32.totalorder %s19, 1
      %p36 = por %p34, %p35
      %p37 = scmp.ne.s32.totalorder %s29, %s32
      %p38 = scmp.eq.s32.totalorder %s19, 0
      %p39 = por %p37, %p38
      %p40 = scmp.ne.s32.totalorder %s29, %s32
      %p41 = scmp.eq.s32.totalorder %s24, 1
      %p42 = por %p40, %p41
      %p43 = scmp.ne.s32.totalorder %s32, %s33
      %p44 = scmp.eq.s32.totalorder %s24, 0
      %p45 = por %p43, %p44
      %p46 = scmp.ne.s32.totalorder %s32, %s33
      %p47 = scmp.eq.s32.totalorder %s25, 1
      %p48 = por %p46, %p47
      %p50 = scmp.ne.s32.totalorder %s33, %s49
      %p51 = scmp.eq.s32.totalorder %s25, 0
      %p52 = por %p50, %p51
      %s54 = sadd.s32 %s53, 1
      %p57 = scmp.eq.s32.totalorder %s19, 1
      %p58 = scmp.ne.s32.totalorder %s53, %s55
      %p59 = scmp.eq.s32.totalorder %s19, 0
      %p60 = por %p58, %p59
      %p61 = scmp.ne.s32.totalorder %s53, %s55
      %p62 = scmp.eq.s32.totalorder %s24, 1
      %p63 = por %p61, %p62
      %p64 = scmp.ne.s32.totalorder %s55, %s56
      %p65 = scmp.eq.s32.totalorder %s24, 0
      %p66 = por %p64, %p65
      %p67 = scmp.ne.s32.totalorder %s55, %s56
      %p68 = scmp.eq.s32.totalorder %s25, 1
      %p69 = por %p67, %p68
      %p71 = scmp.ne.s32.totalorder %s56, %s70
      %p72 = scmp.eq.s32.totalorder %s25, 0
      %p73 = por %p71, %p72
      %s75 = sadd.s32 %s74, 1
      %p78 = scmp.eq.s32.totalorder %s19, 1
      %p79 = scmp.ne.s32.totalorder %s74, %s76
      %p80 = scmp.eq.s32.totalorder %s19, 0
      %p81 = por %p79, %p80
      %p82 = scmp.ne.s32.totalorder %s74, %s76
      %p83 = scmp.eq.s32.totalorder %s24, 1
      %p84 = por %p82, %p83
      %p85 = scmp.ne.s32.totalorder %s76, %s77
      %p86 = scmp.eq.s32.totalorder %s24, 0
      %p87 = por %p85, %p86
      %p88 = scmp.ne.s32.totalorder %s76, %s77
      %p89 = scmp.eq.s32.totalorder %s25, 1
      %p90 = por %p88, %p89
      %p92 = scmp.ne.s32.totalorder %s77, %s91
      %p93 = scmp.eq.s32.totalorder %s25, 0
      %p94 = por %p92, %p93
      %s96 = sadd.s32 %s95, 1
      %p99 = scmp.eq.s32.totalorder %s19, 1
      %p100 = scmp.ne.s32.totalorder %s95, %s97
      %p101 = scmp.eq.s32.totalorder %s19, 0
      %p102 = por %p100, %p101
      %p103 = scmp.ne.s32.totalorder %s95, %s97
      %p104 = scmp.eq.s32.totalorder %s24, 1
      %p105 = por %p103, %p104
      %p106 = scmp.ne.s32.totalorder %s97, %s98
      %p107 = scmp.eq.s32.totalorder %s24, 0
      %p108 = por %p106, %p107
      %p109 = scmp.ne.s32.totalorder %s97, %s98
      %p110 = scmp.eq.s32.totalorder %s25, 1
      %p111 = por %p109, %p110
      %p113 = scmp.ne.s32.totalorder %s98, %s112
      %p114 = scmp.eq.s32.totalorder %s25, 0
      %p115 = por %p113, %p114
      %s117 = sadd.s32 %s116, 1
      %p120 = scmp.eq.s32.totalorder %s19, 1
      %p121 = scmp.ne.s32.totalorder %s116, %s118
      %p122 = scmp.eq.s32.totalorder %s19, 0
      %p123 = por %p121, %p122
      %p124 = scmp.ne.s32.totalorder %s116, %s118
      %p125 = scmp.eq.s32.totalorder %s24, 1
      %p126 = por %p124, %p125
      %p127 = scmp.ne.s32.totalorder %s118, %s119
      %p128 = scmp.eq.s32.totalorder %s24, 0
      %p129 = por %p127, %p128
      %p130 = scmp.ne.s32.totalorder %s118, %s119
      %p131 = scmp.eq.s32.totalorder %s25, 1
      %p132 = por %p130, %p131
      %p134 = scmp.ne.s32.totalorder %s119, %s133
      %p135 = scmp.eq.s32.totalorder %s25, 0
      %p136 = por %p134, %p135
      %s137 = ssub.s32 %s19, %s26
      %p138 = scmp.eq.s32.totalorder %s137, 0
      %s140 = sadd.s32 %s139, 1
      %s141 = scalar_select %p138, %s139, %s140
      %p144 = pneg %p138
      %p145 = scmp.eq.s32.totalorder %s19, 1
      %p146 = por %p144, %p145
      %p147 = scmp.ne.s32.totalorder %s139, %s142
      %p148 = scmp.eq.s32.totalorder %s19, 0
      %p149 = por %p147, %p148
      %p150 = scmp.ne.s32.totalorder %s139, %s142
      %p151 = scmp.eq.s32.totalorder %s24, 1
      %p152 = por %p150, %p151
      %p153 = scmp.ne.s32.totalorder %s142, %s143
      %p154 = scmp.eq.s32.totalorder %s24, 0
      %p155 = por %p153, %p154
      %p156 = scmp.ne.s32.totalorder %s142, %s143
      %p157 = scmp.eq.s32.totalorder %s25, 1
      %p158 = por %p156, %p157
      %p160 = scmp.ne.s32.totalorder %s143, %s159
      %p161 = scmp.eq.s32.totalorder %s25, 0
      %p162 = por %p160, %p161
      %p163 = scmp.le.s32.totalorder 1, %s19
      %p164 = scmp.lt.s32.totalorder %s19, 3
      %p165 = pnand %p163, %p164
      %p166 = pneg %p165
      // Predicated region
      $region9: #{tpu_custom_call.1} parent=5 // pred_check
        _
      $region10: #{tpu_custom_call.1} parent=5 // pred_check_branch
        %168 = sbr.rel (%p165) target = $region12
      $region11: #{tpu_custom_call.1} parent=5 // pred_region
        %s169 = ssub.s32 %s19, 1
        // Predicated region
        $region13: #{tpu_custom_call.1} parent=11 // pred_check
          %p170 = pneg %p66
        $region14: #{tpu_custom_call.1} parent=11 // pred_check_branch
          %172 = sbr.rel (%p170) target = $region16
        $region15: #{tpu_custom_call.1} parent=11 // pred_region
          %174 = vsyncadd [#allocation6], 0
          %s175 = sshll.u32 %s1, 4
          %s176 = int_to_ptr.hbm [resolvable:$true] %s175
          %s177 = sshll.u32 [#allocation5], 4
          %s178 = int_to_ptr.vmem [resolvable:$true] %s177
          %183 = dma.hbm_to_vmem [thread:$0]  %s176, 3072, %s178, [#allocation6], 192, 192, 12
        $region16: #{tpu_custom_call.1} parent=11 // pred_fallthru
          _
        // Predicated region
        $region17: #{tpu_custom_call.1} parent=11 // pred_check
          %p184 = pneg %p87
        $region18: #{tpu_custom_call.1} parent=11 // pred_check_branch
          %186 = sbr.rel (%p184) target = $region20
        $region19: #{tpu_custom_call.1} parent=11 // pred_region
          %188 = vsyncadd [#allocation6], 0
          %s190 = sshll.u32 %s2, 4
          %s191 = int_to_ptr.hbm [resolvable:$true] %s190
          %s192 = sshll.u32 [#allocation7], 4
          %s193 = int_to_ptr.vmem [resolvable:$true] %s192
          %195 = dma.hbm_to_vmem [thread:$0]  %s191, 48, %s193, [#allocation6]
        $region20: #{tpu_custom_call.1} parent=11 // pred_fallthru
          _
        // Predicated region
        $region21: #{tpu_custom_call.1} parent=11 // pred_check
          %p196 = pneg %p108
        $region22: #{tpu_custom_call.1} parent=11 // pred_check_branch
          %198 = sbr.rel (%p196) target = $region24
        $region23: #{tpu_custom_call.1} parent=11 // pred_region
          %200 = vsyncadd [#allocation9], 0
          %s201 = sshll.u32 %s3, 4
          %s202 = int_to_ptr.hbm [resolvable:$true] %s201
          %s203 = sshll.u32 [#allocation8], 4
          %s204 = int_to_ptr.vmem [resolvable:$true] %s203
          %209 = dma.hbm_to_vmem [thread:$0]  %s202, 1024, %s204, [#allocation9], 64, 64, 4
        $region24: #{tpu_custom_call.1} parent=11 // pred_fallthru
          _
        // Predicated region
        $region25: #{tpu_custom_call.1} parent=11 // pred_check
          %p210 = pneg %p129
        $region26: #{tpu_custom_call.1} parent=11 // pred_check_branch
          %212 = sbr.rel (%p210) target = $region28
        $region27: #{tpu_custom_call.1} parent=11 // pred_region
          _
        $region28: #{tpu_custom_call.1} parent=11 // pred_fallthru
          _
      $region12: #{tpu_custom_call.1} parent=5 // pred_fallthru
        _
      %p213 = scmp.lt.s32.totalorder %s19, 2
      // Predicated region
      $region29: #{tpu_custom_call.1} parent=5 // pred_check
        %p214 = pneg %p213
      $region30: #{tpu_custom_call.1} parent=5 // pred_check_branch
        %216 = sbr.rel (%p214) target = $region32
      $region31: #{tpu_custom_call.1} parent=5 // pred_region
        // Predicated region
        $region33: #{tpu_custom_call.1} parent=31 // pred_check
          %p217 = pneg %p39
        $region34: #{tpu_custom_call.1} parent=31 // pred_check_branch
          %219 = sbr.rel (%p217) target = $region36
        $region35: #{tpu_custom_call.1} parent=31 // pred_region
          %s220 = sand.u32 %s29, 1
          %s221 = scalar_lea.sflag [#allocation3], %s220
          %s222 = sand.u32 %s29, 1
          %s223 = smul.addr %s222, 128
          %s224 = scalar_lea.vmem [#allocation2], %s223
          %226 = vsyncadd %s221, 0
          %s227 = smul.addr %s19, 16
          %s228 = smul.addr %s227, 8
          %s229 = scalar_lea.hbm %s0, %s228
          %s230 = sshll.u32 %s229, 4
          %s231 = int_to_ptr.hbm [resolvable:$true] %s230
          %s232 = sshll.u32 %s224, 4
          %s233 = int_to_ptr.vmem [resolvable:$true] %s232
          %238 = dma.hbm_to_vmem [thread:$0]  %s231, 2048, %s233, %s221, 128, 128, 8
        $region36: #{tpu_custom_call.1} parent=31 // pred_fallthru
          _
      $region32: #{tpu_custom_call.1} parent=5 // pred_fallthru
        _
      %p239 = scmp.le.s32.totalorder 1, %s19
      %p240 = scmp.lt.s32.totalorder %s19, 3
      %p241 = pnand %p239, %p240
      %p242 = pneg %p241
      // Predicated region
      $region37: #{tpu_custom_call.1} parent=5 // pred_check
        _
      $region38: #{tpu_custom_call.1} parent=5 // pred_check_branch
        %244 = sbr.rel (%p241) target = $region40
      $region39: #{tpu_custom_call.1} parent=5 // pred_region
        %s245 = ssub.s32 %s19, 1
        %s246 = sand.u32 %s32, 1
        %s247 = scalar_lea.sflag [#allocation3], %s246
        %s248 = sand.u32 %s32, 1
        %s249 = smul.addr %s248, 128
        %s250 = scalar_lea.vmem [#allocation2], %s249
        // Predicated region
        $region41: #{tpu_custom_call.1} parent=39 // pred_check
          %p251 = pneg %p45
        $region42: #{tpu_custom_call.1} parent=39 // pred_check_branch
          %253 = sbr.rel (%p251) target = $region44
        $region43: #{tpu_custom_call.1} parent=39 // pred_region
          %255 = dma.done %s247, 2048
        $region44: #{tpu_custom_call.1} parent=39 // pred_fallthru
          _
        // Predicated region
        $region45: #{tpu_custom_call.1} parent=39 // pred_check
          %p256 = pneg %p66
        $region46: #{tpu_custom_call.1} parent=39 // pred_check_branch
          %258 = sbr.rel (%p256) target = $region48
        $region47: #{tpu_custom_call.1} parent=39 // pred_region
          %260 = dma.done [#allocation6], 3072
        $region48: #{tpu_custom_call.1} parent=39 // pred_fallthru
          _
        // Predicated region
        $region49: #{tpu_custom_call.1} parent=39 // pred_check
          %p261 = pneg %p87
        $region50: #{tpu_custom_call.1} parent=39 // pred_check_branch
          %263 = sbr.rel (%p261) target = $region52
        $region51: #{tpu_custom_call.1} parent=39 // pred_region
          %265 = dma.done [#allocation6], 48
        $region52: #{tpu_custom_call.1} parent=39 // pred_fallthru
          _
        // Predicated region
        $region53: #{tpu_custom_call.1} parent=39 // pred_check
          %p266 = pneg %p108
        $region54: #{tpu_custom_call.1} parent=39 // pred_check_branch
          %268 = sbr.rel (%p266) target = $region56
        $region55: #{tpu_custom_call.1} parent=39 // pred_region
          %270 = dma.done [#allocation9], 1024
        $region56: #{tpu_custom_call.1} parent=39 // pred_fallthru
          _
        %s271 = sand.u32 %s32, 1
        %s272 = scalar_lea.sflag [#allocation3], %s271
        %s273 = sand.u32 %s32, 1
        %s274 = smul.addr %s273, 128
        %s275 = scalar_lea.vmem [#allocation2], %s274
        %p276 = pneg %p45
        %p277 = pneg %p42
        %p278 = pneg %p66
        %p279 = pneg %p63
        %p280 = pneg %p87
        %p281 = pneg %p84
        %p282 = pneg %p108
        %p283 = pneg %p105
        %p284 = pneg %p129
        %p285 = pneg %p126
        %p286 = pneg %p155
        %p287 = pneg %p152
        %s288 = sand.u32 %s142, 1
        %s289 = scalar_lea.sflag [#allocation4], %s288
        %s290 = sand.u32 %s142, 1
        %s291 = smul.addr %s290, 128
        %s292 = scalar_lea.vmem [#allocation10], %s291
        %v294 = vld [vmem:[%s250] sm:$0xff]
        %v295 = vld [vmem:[%s250 + $0x8] sm:$0xff]
        %v296 = vld [vmem:[%s250 + $0x10] sm:$0xff]
        %v297 = vld [vmem:[%s250 + $0x18] sm:$0xff]
        %v298 = vld [vmem:[%s250 + $0x20] sm:$0xff]
        %v299 = vld [vmem:[%s250 + $0x28] sm:$0xff]
        %v300 = vld [vmem:[%s250 + $0x30] sm:$0xff]
        %v301 = vld [vmem:[%s250 + $0x38] sm:$0xff]
        %v302 = vld [vmem:[%s250 + $0x40] sm:$0xff]
        %v303 = vld [vmem:[%s250 + $0x48] sm:$0xff]
        %v304 = vld [vmem:[%s250 + $0x50] sm:$0xff]
        %v305 = vld [vmem:[%s250 + $0x58] sm:$0xff]
        %v306 = vld [vmem:[%s250 + $0x60] sm:$0xff]
        %v307 = vld [vmem:[%s250 + $0x68] sm:$0xff]
        %v308 = vld [vmem:[%s250 + $0x70] sm:$0xff]
        %v309 = vld [vmem:[%s250 + $0x78] sm:$0xff]
        %v310 = vpack.c.bf16 %v295, %v294
        %v311 = vpack.c.bf16 %v297, %v296
        %v312 = vpack.c.bf16 %v299, %v298
        %v313 = vpack.c.bf16 %v301, %v300
        %v314 = vpack.c.bf16 %v303, %v302
        %v315 = vpack.c.bf16 %v305, %v304
        %v316 = vpack.c.bf16 %v307, %v306
        %v317 = vpack.c.bf16 %v309, %v308
        %v318 = vld [vmem:[#allocation5] sm:$0xff]
        %v319 = vld [vmem:[#allocation5 + $0x8] sm:$0xf]
        %v320 = vld [vmem:[#allocation5 + $0xc] sm:$0xff]
        %v321 = vld [vmem:[#allocation5 + $0x14] sm:$0xf]
        %v322 = vld [vmem:[#allocation5 + $0x18] sm:$0xff]
        %v323 = vld [vmem:[#allocation5 + $0x20] sm:$0xf]
        %v324 = vld [vmem:[#allocation5 + $0x24] sm:$0xff]
        %v325 = vld [vmem:[#allocation5 + $0x2c] sm:$0xf]
        %v326 = vld [vmem:[#allocation5 + $0x30] sm:$0xff]
        %v327 = vld [vmem:[#allocation5 + $0x38] sm:$0xf]
        %v328 = vld [vmem:[#allocation5 + $0x3c] sm:$0xff]
        %v329 = vld [vmem:[#allocation5 + $0x44] sm:$0xf]
        %v330 = vld [vmem:[#allocation5 + $0x48] sm:$0xff]
        %v331 = vld [vmem:[#allocation5 + $0x50] sm:$0xf]
        %v332 = vld [vmem:[#allocation5 + $0x54] sm:$0xff]
        %v333 = vld [vmem:[#allocation5 + $0x5c] sm:$0xf]
        %v334 = vld [vmem:[#allocation5 + $0x60] sm:$0xff]
        %v335 = vld [vmem:[#allocation5 + $0x68] sm:$0xf]
        %v336 = vld [vmem:[#allocation5 + $0x6c] sm:$0xff]
        %v337 = vld [vmem:[#allocation5 + $0x74] sm:$0xf]
        %v338 = vld [vmem:[#allocation5 + $0x78] sm:$0xff]
        %v339 = vld [vmem:[#allocation5 + $0x80] sm:$0xf]
        %v340 = vld [vmem:[#allocation5 + $0x84] sm:$0xff]
        %v341 = vld [vmem:[#allocation5 + $0x8c] sm:$0xf]
        %v342 = vld [vmem:[#allocation5 + $0x90] sm:$0xff]
        %v343 = vld [vmem:[#allocation5 + $0x98] sm:$0xf]
        %v344 = vld [vmem:[#allocation5 + $0x9c] sm:$0xff]
        %v345 = vld [vmem:[#allocation5 + $0xa4] sm:$0xf]
        %v346 = vld [vmem:[#allocation5 + $0xa8] sm:$0xff]
        %v347 = vld [vmem:[#allocation5 + $0xb0] sm:$0xf]
        %v348 = vld [vmem:[#allocation5 + $0xb4] sm:$0xff]
        %v349 = vld [vmem:[#allocation5 + $0xbc] sm:$0xf]
        %v350 = vld [vmem:[#allocation7] sm:$0x7]
        %v352 = vperm.slane %v350, 0
        %v353 = vperm.slane %v350, 1
        %v354 = vperm.slane %v350, 2
        %v390 = vunpack.c.l.b16 %v318
        %v391 = vunpack.c.h.b16 %v318
        %v392 = vunpack.c.l.b16 %v319
        %v393 = vunpack.c.l.b16 %v320
        %v394 = vunpack.c.h.b16 %v320
        %v395 = vunpack.c.l.b16 %v321
        %v396 = vunpack.c.l.b16 %v322
        %v397 = vunpack.c.h.b16 %v322
        %v398 = vunpack.c.l.b16 %v323
        %v399 = vunpack.c.l.b16 %v324
        %v400 = vunpack.c.h.b16 %v324
        %v401 = vunpack.c.l.b16 %v325
        %v402 = vunpack.c.l.b16 %v326
        %v403 = vunpack.c.h.b16 %v326
        %v404 = vunpack.c.l.b16 %v327
        %v405 = vunpack.c.l.b16 %v328
        %v406 = vunpack.c.h.b16 %v328
        %v407 = vunpack.c.l.b16 %v329
        %v408 = vunpack.c.l.b16 %v330
        %v409 = vunpack.c.h.b16 %v330
        %v410 = vunpack.c.l.b16 %v331
        %v411 = vunpack.c.l.b16 %v332
        %v412 = vunpack.c.h.b16 %v332
        %v413 = vunpack.c.l.b16 %v333
        %v414 = vunpack.c.l.b16 %v334
        %v415 = vunpack.c.h.b16 %v334
        %v416 = vunpack.c.l.b16 %v335
        %v417 = vunpack.c.l.b16 %v336
        %v418 = vunpack.c.h.b16 %v336
        %v419 = vunpack.c.l.b16 %v337
        %v420 = vunpack.c.l.b16 %v338
        %v421 = vunpack.c.h.b16 %v338
        %v422 = vunpack.c.l.b16 %v339
        %v423 = vunpack.c.l.b16 %v340
        %v424 = vunpack.c.h.b16 %v340
        %v425 = vunpack.c.l.b16 %v341
        %v426 = vunpack.c.l.b16 %v342
        %v427 = vunpack.c.h.b16 %v342
        %v428 = vunpack.c.l.b16 %v343
        %v429 = vunpack.c.l.b16 %v344
        %v430 = vunpack.c.h.b16 %v344
        %v431 = vunpack.c.l.b16 %v345
        %v432 = vunpack.c.l.b16 %v346
        %v433 = vunpack.c.h.b16 %v346
        %v434 = vunpack.c.l.b16 %v347
        %v435 = vunpack.c.l.b16 %v348
        %v436 = vunpack.c.h.b16 %v348
        %v437 = vunpack.c.l.b16 %v349
        %v438 = vpack.c.b16 %v393, %v390
        %v439 = vpack.c.b16 %v394, %v391
        %v440 = vpack.c.b16 %v395, %v392
        %v441 = vpack.c.b16 %v399, %v396
        %v442 = vpack.c.b16 %v400, %v397
        %v443 = vpack.c.b16 %v401, %v398
        %v444 = vpack.c.b16 %v405, %v402
        %v445 = vpack.c.b16 %v406, %v403
        %v446 = vpack.c.b16 %v407, %v404
        %v447 = vpack.c.b16 %v411, %v408
        %v448 = vpack.c.b16 %v412, %v409
        %v449 = vpack.c.b16 %v413, %v410
        %v450 = vpack.c.b16 %v417, %v414
        %v451 = vpack.c.b16 %v418, %v415
        %v452 = vpack.c.b16 %v419, %v416
        %v453 = vpack.c.b16 %v423, %v420
        %v454 = vpack.c.b16 %v424, %v421
        %v455 = vpack.c.b16 %v425, %v422
        %v456 = vpack.c.b16 %v429, %v426
        %v457 = vpack.c.b16 %v430, %v427
        %v458 = vpack.c.b16 %v431, %v428
        %v459 = vpack.c.b16 %v435, %v432
        %v460 = vpack.c.b16 %v436, %v433
        %v461 = vpack.c.b16 %v437, %v434
        %486 = vmatpush.bf16.msra.mxu0 %v459
        %487 = vmatpush.bf16.msra.mxu0 %v456
        %488 = vmatpush.bf16.msra.mxu0 %v453
        %489 = vmatpush.bf16.msra.mxu0 %v450
        %490 = vmatpush.bf16.msra.mxu0 %v447
        %491 = vmatpush.bf16.msra.mxu0 %v444
        %492 = vmatpush.bf16.msra.mxu0 %v441
        %493 = vmatpush.bf16.msra.mxu0 %v438
        %494 = vmatmul.bf16.gmra.mxu0 %v310
        %v495 = vpop.f32.mrf.mxu0
        %v496 = vadd.f32 %v352, %v495
        %v497 = vpop.f32.mrf.mxu0
        %v498 = vadd.f32 %v352, %v497
        %499 = vmatmul.bf16.gmra.mxu0 %v311
        %v500 = vpop.f32.mrf.mxu0
        %v501 = vadd.f32 %v352, %v500
        %v502 = vpop.f32.mrf.mxu0
        %v503 = vadd.f32 %v352, %v502
        %504 = vmatmul.bf16.gmra.mxu0 %v312
        %v505 = vpop.f32.mrf.mxu0
        %v506 = vadd.f32 %v352, %v505
        %v507 = vpop.f32.mrf.mxu0
        %v508 = vadd.f32 %v352, %v507
        %509 = vmatmul.bf16.gmra.mxu0 %v313
        %v510 = vpop.f32.mrf.mxu0
        %v511 = vadd.f32 %v352, %v510
        %v512 = vpop.f32.mrf.mxu0
        %v513 = vadd.f32 %v352, %v512
        %514 = vmatmul.bf16.gmra.mxu0 %v314
        %v515 = vpop.f32.mrf.mxu0
        %v516 = vadd.f32 %v352, %v515
        %v517 = vpop.f32.mrf.mxu0
        %v518 = vadd.f32 %v352, %v517
        %519 = vmatmul.bf16.gmra.mxu0 %v315
        %v520 = vpop.f32.mrf.mxu0
        %v521 = vadd.f32 %v352, %v520
        %v522 = vpop.f32.mrf.mxu0
        %v523 = vadd.f32 %v352, %v522
        %524 = vmatmul.bf16.gmra.mxu0 %v316
        %v525 = vpop.f32.mrf.mxu0
        %v526 = vadd.f32 %v352, %v525
        %v527 = vpop.f32.mrf.mxu0
        %v528 = vadd.f32 %v352, %v527
        %529 = vmatmul.bf16.gmra.mxu0 %v317
        %v530 = vpop.f32.mrf.mxu0
        %v531 = vadd.f32 %v352, %v530
        %v532 = vpop.f32.mrf.mxu0
        %v533 = vadd.f32 %v352, %v532
        %534 = vdwg.mxu0
        %535 = vmatpush.bf16.msra.mxu0 %v460
        %536 = vmatpush.bf16.msra.mxu0 %v457
        %537 = vmatpush.bf16.msra.mxu0 %v454
        %538 = vmatpush.bf16.msra.mxu0 %v451
        %539 = vmatpush.bf16.msra.mxu0 %v448
        %540 = vmatpush.bf16.msra.mxu0 %v445
        %541 = vmatpush.bf16.msra.mxu0 %v442
        %542 = vmatpush.bf16.msra.mxu0 %v439
        %543 = vmatmul.bf16.gmra.mxu0 %v310
        %v544 = vpop.f32.mrf.mxu0
        %v545 = vadd.f32 %v353, %v544
        %v546 = vpop.f32.mrf.mxu0
        %v547 = vadd.f32 %v353, %v546
        %548 = vmatmul.bf16.gmra.mxu0 %v311
        %v549 = vpop.f32.mrf.mxu0
        %v550 = vadd.f32 %v353, %v549
        %v551 = vpop.f32.mrf.mxu0
        %v552 = vadd.f32 %v353, %v551
        %553 = vmatmul.bf16.gmra.mxu0 %v312
        %v554 = vpop.f32.mrf.mxu0
        %v555 = vadd.f32 %v353, %v554
        %v556 = vpop.f32.mrf.mxu0
        %v557 = vadd.f32 %v353, %v556
        %558 = vmatmul.bf16.gmra.mxu0 %v313
        %v559 = vpop.f32.mrf.mxu0
        %v560 = vadd.f32 %v353, %v559
        %v561 = vpop.f32.mrf.mxu0
        %v562 = vadd.f32 %v353, %v561
        %563 = vmatmul.bf16.gmra.mxu0 %v314
        %v564 = vpop.f32.mrf.mxu0
        %v565 = vadd.f32 %v353, %v564
        %v566 = vpop.f32.mrf.mxu0
        %v567 = vadd.f32 %v353, %v566
        %568 = vmatmul.bf16.gmra.mxu0 %v315
        %v569 = vpop.f32.mrf.mxu0
        %v570 = vadd.f32 %v353, %v569
        %v571 = vpop.f32.mrf.mxu0
        %v572 = vadd.f32 %v353, %v571
        %573 = vmatmul.bf16.gmra.mxu0 %v316
        %v574 = vpop.f32.mrf.mxu0
        %v575 = vadd.f32 %v353, %v574
        %v576 = vpop.f32.mrf.mxu0
        %v577 = vadd.f32 %v353, %v576
        %578 = vmatmul.bf16.gmra.mxu0 %v317
        %v579 = vpop.f32.mrf.mxu0
        %v580 = vadd.f32 %v353, %v579
        %v581 = vpop.f32.mrf.mxu0
        %v582 = vadd.f32 %v353, %v581
        %583 = vdwg.mxu0
        %584 = vmatpush.bf16.msra.mxu0 %v461
        %585 = vmatpush.bf16.msra.mxu0 %v458
        %586 = vmatpush.bf16.msra.mxu0 %v455
        %587 = vmatpush.bf16.msra.mxu0 %v452
        %588 = vmatpush.bf16.msra.mxu0 %v449
        %589 = vmatpush.bf16.msra.mxu0 %v446
        %590 = vmatpush.bf16.msra.mxu0 %v443
        %591 = vmatpush.bf16.msra.mxu0 %v440
        %592 = vmatmul.bf16.gmra.mxu0 %v310
        %v593 = vpop.f32.mrf.mxu0
        %v594 = vadd.f32 %v354, %v593
        %v595 = vpop.f32.mrf.mxu0
        %v596 = vadd.f32 %v354, %v595
        %597 = vmatmul.bf16.gmra.mxu0 %v311
        %v598 = vpop.f32.mrf.mxu0
        %v599 = vadd.f32 %v354, %v598
        %v600 = vpop.f32.mrf.mxu0
        %v601 = vadd.f32 %v354, %v600
        %602 = vmatmul.bf16.gmra.mxu0 %v312
        %v603 = vpop.f32.mrf.mxu0
        %v604 = vadd.f32 %v354, %v603
        %v605 = vpop.f32.mrf.mxu0
        %v606 = vadd.f32 %v354, %v605
        %607 = vmatmul.bf16.gmra.mxu0 %v313
        %v608 = vpop.f32.mrf.mxu0
        %v609 = vadd.f32 %v354, %v608
        %v610 = vpop.f32.mrf.mxu0
        %v611 = vadd.f32 %v354, %v610
        %612 = vmatmul.bf16.gmra.mxu0 %v314
        %v613 = vpop.f32.mrf.mxu0
        %v614 = vadd.f32 %v354, %v613
        %v615 = vpop.f32.mrf.mxu0
        %v616 = vadd.f32 %v354, %v615
        %617 = vmatmul.bf16.gmra.mxu0 %v315
        %v618 = vpop.f32.mrf.mxu0
        %v619 = vadd.f32 %v354, %v618
        %v620 = vpop.f32.mrf.mxu0
        %v621 = vadd.f32 %v354, %v620
        %622 = vmatmul.bf16.gmra.mxu0 %v316
        %v623 = vpop.f32.mrf.mxu0
        %v624 = vadd.f32 %v354, %v623
        %v625 = vpop.f32.mrf.mxu0
        %v626 = vadd.f32 %v354, %v625
        %627 = vmatmul.bf16.gmra.mxu0 %v317
        %v628 = vpop.f32.mrf.mxu0
        %v629 = vadd.f32 %v354, %v628
        %v630 = vpop.f32.mrf.mxu0
        %v631 = vadd.f32 %v354, %v630
        %632 = vdwg.mxu0
        %v633 = vmul.f32 %v496, 0.17677669
        %v634 = vmul.f32 %v498, 0.17677669
        %v635 = vmul.f32 %v501, 0.17677669
        %v636 = vmul.f32 %v503, 0.17677669
        %v637 = vmul.f32 %v506, 0.17677669
        %v638 = vmul.f32 %v508, 0.17677669
        %v639 = vmul.f32 %v511, 0.17677669
        %v640 = vmul.f32 %v513, 0.17677669
        %v641 = vmul.f32 %v516, 0.17677669
        %v642 = vmul.f32 %v518, 0.17677669
        %v643 = vmul.f32 %v521, 0.17677669
        %v644 = vmul.f32 %v523, 0.17677669
        %v645 = vmul.f32 %v526, 0.17677669
        %v646 = vmul.f32 %v528, 0.17677669
        %v647 = vmul.f32 %v531, 0.17677669
        %v648 = vmul.f32 %v533, 0.17677669
        %v649 = vpack.c.bf16 %v633, %v633
        %v650 = vpack.c.bf16 %v634, %v634
        %v651 = vpack.c.bf16 %v635, %v635
        %v652 = vpack.c.bf16 %v636, %v636
        %v653 = vpack.c.bf16 %v637, %v637
        %v654 = vpack.c.bf16 %v638, %v638
        %v655 = vpack.c.bf16 %v639, %v639
        %v656 = vpack.c.bf16 %v640, %v640
        %v657 = vpack.c.bf16 %v641, %v641
        %v658 = vpack.c.bf16 %v642, %v642
        %v659 = vpack.c.bf16 %v643, %v643
        %v660 = vpack.c.bf16 %v644, %v644
        %v661 = vpack.c.bf16 %v645, %v645
        %v662 = vpack.c.bf16 %v646, %v646
        %v663 = vpack.c.bf16 %v647, %v647
        %v664 = vpack.c.bf16 %v648, %v648
        %v665 = vpack.c.bf16 %v545, %v545
        %v666 = vpack.c.bf16 %v547, %v547
        %v667 = vpack.c.bf16 %v550, %v550
        %v668 = vpack.c.bf16 %v552, %v552
        %v669 = vpack.c.bf16 %v555, %v555
        %v670 = vpack.c.bf16 %v557, %v557
        %v671 = vpack.c.bf16 %v560, %v560
        %v672 = vpack.c.bf16 %v562, %v562
        %v673 = vpack.c.bf16 %v565, %v565
        %v674 = vpack.c.bf16 %v567, %v567
        %v675 = vpack.c.bf16 %v570, %v570
        %v676 = vpack.c.bf16 %v572, %v572
        %v677 = vpack.c.bf16 %v575, %v575
        %v678 = vpack.c.bf16 %v577, %v577
        %v679 = vpack.c.bf16 %v580, %v580
        %v680 = vpack.c.bf16 %v582, %v582
        %v681 = vpack.c.bf16 %v594, %v594
        %v682 = vpack.c.bf16 %v596, %v596
        %v683 = vpack.c.bf16 %v599, %v599
        %v684 = vpack.c.bf16 %v601, %v601
        %v685 = vpack.c.bf16 %v604, %v604
        %v686 = vpack.c.bf16 %v606, %v606
        %v687 = vpack.c.bf16 %v609, %v609
        %v688 = vpack.c.bf16 %v611, %v611
        %v689 = vpack.c.bf16 %v614, %v614
        %v690 = vpack.c.bf16 %v616, %v616
        %v691 = vpack.c.bf16 %v619, %v619
        %v692 = vpack.c.bf16 %v621, %v621
        %v693 = vpack.c.bf16 %v624, %v624
        %v694 = vpack.c.bf16 %v626, %v626
        %v695 = vpack.c.bf16 %v629, %v629
        %v696 = vpack.c.bf16 %v631, %v631
        %v697 = vld [vmem:[#allocation8] sm:$0xf]
        %v698 = vld [vmem:[#allocation8 + $0x4] sm:$0xf]
        %v699 = vld [vmem:[#allocation8 + $0x8] sm:$0xf]
        %v700 = vld [vmem:[#allocation8 + $0xc] sm:$0xf]
        %v701 = vld [vmem:[#allocation8 + $0x10] sm:$0xf]
        %v702 = vld [vmem:[#allocation8 + $0x14] sm:$0xf]
        %v703 = vld [vmem:[#allocation8 + $0x18] sm:$0xf]
        %v704 = vld [vmem:[#allocation8 + $0x1c] sm:$0xf]
        %v705 = vld [vmem:[#allocation8 + $0x20] sm:$0xf]
        %v706 = vld [vmem:[#allocation8 + $0x24] sm:$0xf]
        %v707 = vld [vmem:[#allocation8 + $0x28] sm:$0xf]
        %v708 = vld [vmem:[#allocation8 + $0x2c] sm:$0xf]
        %v709 = vld [vmem:[#allocation8 + $0x30] sm:$0xf]
        %v710 = vld [vmem:[#allocation8 + $0x34] sm:$0xf]
        %v711 = vld [vmem:[#allocation8 + $0x38] sm:$0xf]
        %v712 = vld [vmem:[#allocation8 + $0x3c] sm:$0xf]
        %v729 = vunpack.c.l.b16 %v649
        %v730 = vunpack.c.l.b16 %v650
        %v731 = vunpack.c.l.b16 %v651
        %v732 = vunpack.c.l.b16 %v652
        %v733 = vunpack.c.l.b16 %v653
        %v734 = vunpack.c.l.b16 %v654
        %v735 = vunpack.c.l.b16 %v655
        %v736 = vunpack.c.l.b16 %v656
        %v737 = vunpack.c.l.b16 %v657
        %v738 = vunpack.c.l.b16 %v658
        %v739 = vunpack.c.l.b16 %v659
        %v740 = vunpack.c.l.b16 %v660
        %v741 = vunpack.c.l.b16 %v661
        %v742 = vunpack.c.l.b16 %v662
        %v743 = vunpack.c.l.b16 %v663
        %v744 = vunpack.c.l.b16 %v664
        %v745 = vpack.c.b16 %v730, %v729
        %v746 = vpack.c.b16 %v732, %v731
        %v747 = vpack.c.b16 %v734, %v733
        %v748 = vpack.c.b16 %v736, %v735
        %v749 = vpack.c.b16 %v738, %v737
        %v750 = vpack.c.b16 %v740, %v739
        %v751 = vpack.c.b16 %v742, %v741
        %v752 = vpack.c.b16 %v744, %v743
        %v769 = vunpack.c.l.b16 %v665
        %v770 = vunpack.c.l.b16 %v666
        %v771 = vunpack.c.l.b16 %v667
        %v772 = vunpack.c.l.b16 %v668
        %v773 = vunpack.c.l.b16 %v669
        %v774 = vunpack.c.l.b16 %v670
        %v775 = vunpack.c.l.b16 %v671
        %v776 = vunpack.c.l.b16 %v672
        %v777 = vunpack.c.l.b16 %v673
        %v778 = vunpack.c.l.b16 %v674
        %v779 = vunpack.c.l.b16 %v675
        %v780 = vunpack.c.l.b16 %v676
        %v781 = vunpack.c.l.b16 %v677
        %v782 = vunpack.c.l.b16 %v678
        %v783 = vunpack.c.l.b16 %v679
        %v784 = vunpack.c.l.b16 %v680
        %v785 = vpack.c.b16 %v770, %v769
        %v786 = vpack.c.b16 %v772, %v771
        %v787 = vpack.c.b16 %v774, %v773
        %v788 = vpack.c.b16 %v776, %v775
        %v789 = vpack.c.b16 %v778, %v777
        %v790 = vpack.c.b16 %v780, %v779
        %v791 = vpack.c.b16 %v782, %v781
        %v792 = vpack.c.b16 %v784, %v783
        %vm793 = vcmask 261120
        %v795 = vsel %vm793, %v745, 0
        %v798 = vsel %vm793, %v746, 0
        %v801 = vsel %vm793, %v747, 0
        %v804 = vsel %vm793, %v748, 0
        %v807 = vsel %vm793, %v749, 0
        %v810 = vsel %vm793, %v750, 0
        %v813 = vsel %vm793, %v751, 0
        %v816 = vsel %vm793, %v752, 0
        %v819 = vsel %vm793, %v785, 0
        %v822 = vsel %vm793, %v786, 0
        %v825 = vsel %vm793, %v787, 0
        %v828 = vsel %vm793, %v788, 0
        %v831 = vsel %vm793, %v789, 0
        %v834 = vsel %vm793, %v790, 0
        %v837 = vsel %vm793, %v791, 0
        %v840 = vsel %vm793, %v792, 0
        %842 = vmatpush.bf16.xpose.msra.mxu0 %v840
        %843 = vmatpush.bf16.xpose.msra.mxu0 %v837
        %844 = vmatpush.bf16.xpose.msra.mxu0 %v834
        %845 = vmatpush.bf16.xpose.msra.mxu0 %v831
        %846 = vmatpush.bf16.xpose.msra.mxu0 %v828
        %847 = vmatpush.bf16.xpose.msra.mxu0 %v825
        %848 = vmatpush.bf16.xpose.msra.mxu0 %v822
        %849 = vmatpush.bf16.xpose.msra.mxu0 %v819
        %850 = vmatmul.bf16.gmra.mxu0 %v795
        %v851 = vpop.f32.mrf.mxu0
        %v852 = vadd.f32 0.0, %v851
        %v853 = vpop.f32.mrf.mxu0
        %v854 = vadd.f32 0.0, %v853
        %855 = vmatmul.bf16.gmra.mxu0 %v798
        %v856 = vpop.f32.mrf.mxu0
        %v857 = vadd.f32 0.0, %v856
        %v858 = vpop.f32.mrf.mxu0
        %v859 = vadd.f32 0.0, %v858
        %860 = vmatmul.bf16.gmra.mxu0 %v801
        %v861 = vpop.f32.mrf.mxu0
        %v862 = vadd.f32 0.0, %v861
        %v863 = vpop.f32.mrf.mxu0
        %v864 = vadd.f32 0.0, %v863
        %865 = vmatmul.bf16.gmra.mxu0 %v804
        %v866 = vpop.f32.mrf.mxu0
        %v867 = vadd.f32 0.0, %v866
        %v868 = vpop.f32.mrf.mxu0
        %v869 = vadd.f32 0.0, %v868
        %870 = vmatmul.bf16.gmra.mxu0 %v807
        %v871 = vpop.f32.mrf.mxu0
        %v872 = vadd.f32 0.0, %v871
        %v873 = vpop.f32.mrf.mxu0
        %v874 = vadd.f32 0.0, %v873
        %875 = vmatmul.bf16.gmra.mxu0 %v810
        %v876 = vpop.f32.mrf.mxu0
        %v877 = vadd.f32 0.0, %v876
        %v878 = vpop.f32.mrf.mxu0
        %v879 = vadd.f32 0.0, %v878
        %880 = vmatmul.bf16.gmra.mxu0 %v813
        %v881 = vpop.f32.mrf.mxu0
        %v882 = vadd.f32 0.0, %v881
        %v883 = vpop.f32.mrf.mxu0
        %v884 = vadd.f32 0.0, %v883
        %885 = vmatmul.bf16.gmra.mxu0 %v816
        %v886 = vpop.f32.mrf.mxu0
        %v887 = vadd.f32 0.0, %v886
        %v888 = vpop.f32.mrf.mxu0
        %v889 = vadd.f32 0.0, %v888
        %890 = vdwg.mxu0
        %891 = vmax.xlane.f32.xlu0 %v852
        %v892 = vpop.xlane.xlu0 %891
        %893 = vmax.xlane.f32.xlu0 %v854
        %v894 = vpop.xlane.xlu0 %893
        %895 = vmax.xlane.f32.xlu0 %v857
        %v896 = vpop.xlane.xlu0 %895
        %897 = vmax.xlane.f32.xlu0 %v859
        %v898 = vpop.xlane.xlu0 %897
        %899 = vmax.xlane.f32.xlu0 %v862
        %v900 = vpop.xlane.xlu0 %899
        %901 = vmax.xlane.f32.xlu0 %v864
        %v902 = vpop.xlane.xlu0 %901
        %903 = vmax.xlane.f32.xlu0 %v867
        %v904 = vpop.xlane.xlu0 %903
        %905 = vmax.xlane.f32.xlu0 %v869
        %v906 = vpop.xlane.xlu0 %905
        %907 = vmax.xlane.f32.xlu0 %v872
        %v908 = vpop.xlane.xlu0 %907
        %909 = vmax.xlane.f32.xlu0 %v874
        %v910 = vpop.xlane.xlu0 %909
        %911 = vmax.xlane.f32.xlu0 %v877
        %v912 = vpop.xlane.xlu0 %911
        %913 = vmax.xlane.f32.xlu0 %v879
        %v914 = vpop.xlane.xlu0 %913
        %915 = vmax.xlane.f32.xlu0 %v882
        %v916 = vpop.xlane.xlu0 %915
        %917 = vmax.xlane.f32.xlu0 %v884
        %v918 = vpop.xlane.xlu0 %917
        %919 = vmax.xlane.f32.xlu0 %v887
        %v920 = vpop.xlane.xlu0 %919
        %921 = vmax.xlane.f32.xlu0 %v889
        %v922 = vpop.xlane.xlu0 %921
        %v923 = vsub.f32 %v852, %v892
        %v924 = vsub.f32 %v854, %v894
        %v925 = vsub.f32 %v857, %v896
        %v926 = vsub.f32 %v859, %v898
        %v927 = vsub.f32 %v862, %v900
        %v928 = vsub.f32 %v864, %v902
        %v929 = vsub.f32 %v867, %v904
        %v930 = vsub.f32 %v869, %v906
        %v931 = vsub.f32 %v872, %v908
        %v932 = vsub.f32 %v874, %v910
        %v933 = vsub.f32 %v877, %v912
        %v934 = vsub.f32 %v879, %v914
        %v935 = vsub.f32 %v882, %v916
        %v936 = vsub.f32 %v884, %v918
        %v937 = vsub.f32 %v887, %v920
        %v938 = vsub.f32 %v889, %v922
        %v939 = vmul.f32 %v923, 1.442695
        %v940 = vpow.pop %v939
        %v941 = vmul.f32 %v924, 1.442695
        %v942 = vpow.pop %v941
        %v943 = vmul.f32 %v925, 1.442695
        %v944 = vpow.pop %v943
        %v945 = vmul.f32 %v926, 1.442695
        %v946 = vpow.pop %v945
        %v947 = vmul.f32 %v927, 1.442695
        %v948 = vpow.pop %v947
        %v949 = vmul.f32 %v928, 1.442695
        %v950 = vpow.pop %v949
        %v951 = vmul.f32 %v929, 1.442695
        %v952 = vpow.pop %v951
        %v953 = vmul.f32 %v930, 1.442695
        %v954 = vpow.pop %v953
        %v955 = vmul.f32 %v931, 1.442695
        %v956 = vpow.pop %v955
        %v957 = vmul.f32 %v932, 1.442695
        %v958 = vpow.pop %v957
        %v959 = vmul.f32 %v933, 1.442695
        %v960 = vpow.pop %v959
        %v961 = vmul.f32 %v934, 1.442695
        %v962 = vpow.pop %v961
        %v963 = vmul.f32 %v935, 1.442695
        %v964 = vpow.pop %v963
        %v965 = vmul.f32 %v936, 1.442695
        %v966 = vpow.pop %v965
        %v967 = vmul.f32 %v937, 1.442695
        %v968 = vpow.pop %v967
        %v969 = vmul.f32 %v938, 1.442695
        %v970 = vpow.pop %v969
        %971 = vadd.xlane.f32.xlu0 %v940
        %v972 = vpop.xlane.xlu0 %971
        %973 = vadd.xlane.f32.xlu0 %v942
        %v974 = vpop.xlane.xlu0 %973
        %975 = vadd.xlane.f32.xlu0 %v944
        %v976 = vpop.xlane.xlu0 %975
        %977 = vadd.xlane.f32.xlu0 %v946
        %v978 = vpop.xlane.xlu0 %977
        %979 = vadd.xlane.f32.xlu0 %v948
        %v980 = vpop.xlane.xlu0 %979
        %981 = vadd.xlane.f32.xlu0 %v950
        %v982 = vpop.xlane.xlu0 %981
        %983 = vadd.xlane.f32.xlu0 %v952
        %v984 = vpop.xlane.xlu0 %983
        %985 = vadd.xlane.f32.xlu0 %v954
        %v986 = vpop.xlane.xlu0 %985
        %987 = vadd.xlane.f32.xlu0 %v956
        %v988 = vpop.xlane.xlu0 %987
        %989 = vadd.xlane.f32.xlu0 %v958
        %v990 = vpop.xlane.xlu0 %989
        %991 = vadd.xlane.f32.xlu0 %v960
        %v992 = vpop.xlane.xlu0 %991
        %993 = vadd.xlane.f32.xlu0 %v962
        %v994 = vpop.xlane.xlu0 %993
        %995 = vadd.xlane.f32.xlu0 %v964
        %v996 = vpop.xlane.xlu0 %995
        %997 = vadd.xlane.f32.xlu0 %v966
        %v998 = vpop.xlane.xlu0 %997
        %999 = vadd.xlane.f32.xlu0 %v968
        %v1000 = vpop.xlane.xlu0 %999
        %1001 = vadd.xlane.f32.xlu0 %v970
        %v1002 = vpop.xlane.xlu0 %1001
        %v1003 = vrcp.pop %v972
        %v1004 = vrcp.pop %v974
        %v1005 = vrcp.pop %v976
        %v1006 = vrcp.pop %v978
        %v1007 = vrcp.pop %v980
        %v1008 = vrcp.pop %v982
        %v1009 = vrcp.pop %v984
        %v1010 = vrcp.pop %v986
        %v1011 = vrcp.pop %v988
        %v1012 = vrcp.pop %v990
        %v1013 = vrcp.pop %v992
        %v1014 = vrcp.pop %v994
        %v1015 = vrcp.pop %v996
        %v1016 = vrcp.pop %v998
        %v1017 = vrcp.pop %v1000
        %v1018 = vrcp.pop %v1002
        %v1019 = vpack.c.bf16 %v942, %v940
        %v1020 = vpack.c.bf16 %v946, %v944
        %v1021 = vpack.c.bf16 %v950, %v948
        %v1022 = vpack.c.bf16 %v954, %v952
        %v1023 = vpack.c.bf16 %v958, %v956
        %v1024 = vpack.c.bf16 %v962, %v960
        %v1025 = vpack.c.bf16 %v966, %v964
        %v1026 = vpack.c.bf16 %v970, %v968
        %v1043 = vunpack.c.l.b16 %v681
        %v1044 = vunpack.c.l.b16 %v682
        %v1045 = vunpack.c.l.b16 %v683
        %v1046 = vunpack.c.l.b16 %v684
        %v1047 = vunpack.c.l.b16 %v685
        %v1048 = vunpack.c.l.b16 %v686
        %v1049 = vunpack.c.l.b16 %v687
        %v1050 = vunpack.c.l.b16 %v688
        %v1051 = vunpack.c.l.b16 %v689
        %v1052 = vunpack.c.l.b16 %v690
        %v1053 = vunpack.c.l.b16 %v691
        %v1054 = vunpack.c.l.b16 %v692
        %v1055 = vunpack.c.l.b16 %v693
        %v1056 = vunpack.c.l.b16 %v694
        %v1057 = vunpack.c.l.b16 %v695
        %v1058 = vunpack.c.l.b16 %v696
        %v1059 = vpack.c.b16 %v1044, %v1043
        %v1060 = vpack.c.b16 %v1046, %v1045
        %v1061 = vpack.c.b16 %v1048, %v1047
        %v1062 = vpack.c.b16 %v1050, %v1049
        %v1063 = vpack.c.b16 %v1052, %v1051
        %v1064 = vpack.c.b16 %v1054, %v1053
        %v1065 = vpack.c.b16 %v1056, %v1055
        %v1066 = vpack.c.b16 %v1058, %v1057
        %1075 = vmatpush.bf16.msra.mxu0 %v1066
        %1076 = vmatpush.bf16.msra.mxu0 %v1065
        %1077 = vmatpush.bf16.msra.mxu0 %v1064
        %1078 = vmatpush.bf16.msra.mxu0 %v1063
        %1079 = vmatpush.bf16.msra.mxu0 %v1062
        %1080 = vmatpush.bf16.msra.mxu0 %v1061
        %1081 = vmatpush.bf16.msra.mxu0 %v1060
        %1082 = vmatpush.bf16.msra.mxu0 %v1059
        %1083 = vmatmul.bf16.gmra.mxu0 %v1019
        %v1084 = vpop.f32.mrf.mxu0
        %v1085 = vadd.f32 0.0, %v1084
        %v1086 = vpop.f32.mrf.mxu0
        %v1087 = vadd.f32 0.0, %v1086
        %1088 = vmatmul.bf16.gmra.mxu0 %v1020
        %v1089 = vpop.f32.mrf.mxu0
        %v1090 = vadd.f32 0.0, %v1089
        %v1091 = vpop.f32.mrf.mxu0
        %v1092 = vadd.f32 0.0, %v1091
        %1093 = vmatmul.bf16.gmra.mxu0 %v1021
        %v1094 = vpop.f32.mrf.mxu0
        %v1095 = vadd.f32 0.0, %v1094
        %v1096 = vpop.f32.mrf.mxu0
        %v1097 = vadd.f32 0.0, %v1096
        %1098 = vmatmul.bf16.gmra.mxu0 %v1022
        %v1099 = vpop.f32.mrf.mxu0
        %v1100 = vadd.f32 0.0, %v1099
        %v1101 = vpop.f32.mrf.mxu0
        %v1102 = vadd.f32 0.0, %v1101
        %1103 = vmatmul.bf16.gmra.mxu0 %v1023
        %v1104 = vpop.f32.mrf.mxu0
        %v1105 = vadd.f32 0.0, %v1104
        %v1106 = vpop.f32.mrf.mxu0
        %v1107 = vadd.f32 0.0, %v1106
        %1108 = vmatmul.bf16.gmra.mxu0 %v1024
        %v1109 = vpop.f32.mrf.mxu0
        %v1110 = vadd.f32 0.0, %v1109
        %v1111 = vpop.f32.mrf.mxu0
        %v1112 = vadd.f32 0.0, %v1111
        %1113 = vmatmul.bf16.gmra.mxu0 %v1025
        %v1114 = vpop.f32.mrf.mxu0
        %v1115 = vadd.f32 0.0, %v1114
        %v1116 = vpop.f32.mrf.mxu0
        %v1117 = vadd.f32 0.0, %v1116
        %1118 = vmatmul.bf16.gmra.mxu0 %v1026
        %v1119 = vpop.f32.mrf.mxu0
        %v1120 = vadd.f32 0.0, %v1119
        %v1121 = vpop.f32.mrf.mxu0
        %v1122 = vadd.f32 0.0, %v1121
        %1123 = vdwg.mxu0
        %v1124 = vmul.f32 %v1085, %v1003
        %v1125 = vmul.f32 %v1087, %v1004
        %v1126 = vmul.f32 %v1090, %v1005
        %v1127 = vmul.f32 %v1092, %v1006
        %v1128 = vmul.f32 %v1095, %v1007
        %v1129 = vmul.f32 %v1097, %v1008
        %v1130 = vmul.f32 %v1100, %v1009
        %v1131 = vmul.f32 %v1102, %v1010
        %v1132 = vmul.f32 %v1105, %v1011
        %v1133 = vmul.f32 %v1107, %v1012
        %v1134 = vmul.f32 %v1110, %v1013
        %v1135 = vmul.f32 %v1112, %v1014
        %v1136 = vmul.f32 %v1115, %v1015
        %v1137 = vmul.f32 %v1117, %v1016
        %v1138 = vmul.f32 %v1120, %v1017
        %v1139 = vmul.f32 %v1122, %v1018
        %v1140 = vpack.c.bf16 %v1125, %v1124
        %v1141 = vpack.c.bf16 %v1127, %v1126
        %v1142 = vpack.c.bf16 %v1129, %v1128
        %v1143 = vpack.c.bf16 %v1131, %v1130
        %v1144 = vpack.c.bf16 %v1133, %v1132
        %v1145 = vpack.c.bf16 %v1135, %v1134
        %v1146 = vpack.c.bf16 %v1137, %v1136
        %v1147 = vpack.c.bf16 %v1139, %v1138
        %1148 = vrot.lane.b32.xlu0 %v745, 96
        %v1149 = vpop.permute.xlu0 %1148
        %1150 = vrot.lane.b32.xlu0 %v746, 96
        %v1151 = vpop.permute.xlu0 %1150
        %1152 = vrot.lane.b32.xlu0 %v747, 96
        %v1153 = vpop.permute.xlu0 %1152
        %1154 = vrot.lane.b32.xlu0 %v748, 96
        %v1155 = vpop.permute.xlu0 %1154
        %1156 = vrot.lane.b32.xlu0 %v749, 96
        %v1157 = vpop.permute.xlu0 %1156
        %1158 = vrot.lane.b32.xlu0 %v750, 96
        %v1159 = vpop.permute.xlu0 %1158
        %1160 = vrot.lane.b32.xlu0 %v751, 96
        %v1161 = vpop.permute.xlu0 %1160
        %1162 = vrot.lane.b32.xlu0 %v752, 96
        %v1163 = vpop.permute.xlu0 %1162
        %1164 = vrot.lane.b32.xlu0 %v785, 96
        %v1165 = vpop.permute.xlu0 %1164
        %1166 = vrot.lane.b32.xlu0 %v786, 96
        %v1167 = vpop.permute.xlu0 %1166
        %1168 = vrot.lane.b32.xlu0 %v787, 96
        %v1169 = vpop.permute.xlu0 %1168
        %1170 = vrot.lane.b32.xlu0 %v788, 96
        %v1171 = vpop.permute.xlu0 %1170
        %1172 = vrot.lane.b32.xlu0 %v789, 96
        %v1173 = vpop.permute.xlu0 %1172
        %1174 = vrot.lane.b32.xlu0 %v790, 96
        %v1175 = vpop.permute.xlu0 %1174
        %1176 = vrot.lane.b32.xlu0 %v791, 96
        %v1177 = vpop.permute.xlu0 %1176
        %1178 = vrot.lane.b32.xlu0 %v792, 96
        %v1179 = vpop.permute.xlu0 %1178
        %v1181 = vsel %vm793, %v1149, 0
        %v1184 = vsel %vm793, %v1151, 0
        %v1187 = vsel %vm793, %v1153, 0
        %v1190 = vsel %vm793, %v1155, 0
        %v1193 = vsel %vm793, %v1157, 0
        %v1196 = vsel %vm793, %v1159, 0
        %v1199 = vsel %vm793, %v1161, 0
        %v1202 = vsel %vm793, %v1163, 0
        %v1205 = vsel %vm793, %v1165, 0
        %v1208 = vsel %vm793, %v1167, 0
        %v1211 = vsel %vm793, %v1169, 0
        %v1214 = vsel %vm793, %v1171, 0
        %v1217 = vsel %vm793, %v1173, 0
        %v1220 = vsel %vm793, %v1175, 0
        %v1223 = vsel %vm793, %v1177, 0
        %v1226 = vsel %vm793, %v1179, 0
        %1228 = vmatpush.bf16.xpose.msra.mxu0 %v1226
        %1229 = vmatpush.bf16.xpose.msra.mxu0 %v1223
        %1230 = vmatpush.bf16.xpose.msra.mxu0 %v1220
        %1231 = vmatpush.bf16.xpose.msra.mxu0 %v1217
        %1232 = vmatpush.bf16.xpose.msra.mxu0 %v1214
        %1233 = vmatpush.bf16.xpose.msra.mxu0 %v1211
        %1234 = vmatpush.bf16.xpose.msra.mxu0 %v1208
        %1235 = vmatpush.bf16.xpose.msra.mxu0 %v1205
        %1236 = vmatmul.bf16.gmra.mxu0 %v1181
        %v1237 = vpop.f32.mrf.mxu0
        %v1238 = vadd.f32 0.0, %v1237
        %v1239 = vpop.f32.mrf.mxu0
        %v1240 = vadd.f32 0.0, %v1239
        %1241 = vmatmul.bf16.gmra.mxu0 %v1184
        %v1242 = vpop.f32.mrf.mxu0
        %v1243 = vadd.f32 0.0, %v1242
        %v1244 = vpop.f32.mrf.mxu0
        %v1245 = vadd.f32 0.0, %v1244
        %1246 = vmatmul.bf16.gmra.mxu0 %v1187
        %v1247 = vpop.f32.mrf.mxu0
        %v1248 = vadd.f32 0.0, %v1247
        %v1249 = vpop.f32.mrf.mxu0
        %v1250 = vadd.f32 0.0, %v1249
        %1251 = vmatmul.bf16.gmra.mxu0 %v1190
        %v1252 = vpop.f32.mrf.mxu0
        %v1253 = vadd.f32 0.0, %v1252
        %v1254 = vpop.f32.mrf.mxu0
        %v1255 = vadd.f32 0.0, %v1254
        %1256 = vmatmul.bf16.gmra.mxu0 %v1193
        %v1257 = vpop.f32.mrf.mxu0
        %v1258 = vadd.f32 0.0, %v1257
        %v1259 = vpop.f32.mrf.mxu0
        %v1260 = vadd.f32 0.0, %v1259
        %1261 = vmatmul.bf16.gmra.mxu0 %v1196
        %v1262 = vpop.f32.mrf.mxu0
        %v1263 = vadd.f32 0.0, %v1262
        %v1264 = vpop.f32.mrf.mxu0
        %v1265 = vadd.f32 0.0, %v1264
        %1266 = vmatmul.bf16.gmra.mxu0 %v1199
        %v1267 = vpop.f32.mrf.mxu0
        %v1268 = vadd.f32 0.0, %v1267
        %v1269 = vpop.f32.mrf.mxu0
        %v1270 = vadd.f32 0.0, %v1269
        %1271 = vmatmul.bf16.gmra.mxu0 %v1202
        %v1272 = vpop.f32.mrf.mxu0
        %v1273 = vadd.f32 0.0, %v1272
        %v1274 = vpop.f32.mrf.mxu0
        %v1275 = vadd.f32 0.0, %v1274
        %1276 = vdwg.mxu0
        %1277 = vmax.xlane.f32.xlu0 %v1238
        %v1278 = vpop.xlane.xlu0 %1277
        %1279 = vmax.xlane.f32.xlu0 %v1240
        %v1280 = vpop.xlane.xlu0 %1279
        %1281 = vmax.xlane.f32.xlu0 %v1243
        %v1282 = vpop.xlane.xlu0 %1281
        %1283 = vmax.xlane.f32.xlu0 %v1245
        %v1284 = vpop.xlane.xlu0 %1283
        %1285 = vmax.xlane.f32.xlu0 %v1248
        %v1286 = vpop.xlane.xlu0 %1285
        %1287 = vmax.xlane.f32.xlu0 %v1250
        %v1288 = vpop.xlane.xlu0 %1287
        %1289 = vmax.xlane.f32.xlu0 %v1253
        %v1290 = vpop.xlane.xlu0 %1289
        %1291 = vmax.xlane.f32.xlu0 %v1255
        %v1292 = vpop.xlane.xlu0 %1291
        %1293 = vmax.xlane.f32.xlu0 %v1258
        %v1294 = vpop.xlane.xlu0 %1293
        %1295 = vmax.xlane.f32.xlu0 %v1260
        %v1296 = vpop.xlane.xlu0 %1295
        %1297 = vmax.xlane.f32.xlu0 %v1263
        %v1298 = vpop.xlane.xlu0 %1297
        %1299 = vmax.xlane.f32.xlu0 %v1265
        %v1300 = vpop.xlane.xlu0 %1299
        %1301 = vmax.xlane.f32.xlu0 %v1268
        %v1302 = vpop.xlane.xlu0 %1301
        %1303 = vmax.xlane.f32.xlu0 %v1270
        %v1304 = vpop.xlane.xlu0 %1303
        %1305 = vmax.xlane.f32.xlu0 %v1273
        %v1306 = vpop.xlane.xlu0 %1305
        %1307 = vmax.xlane.f32.xlu0 %v1275
        %v1308 = vpop.xlane.xlu0 %1307
        %v1309 = vsub.f32 %v1238, %v1278
        %v1310 = vsub.f32 %v1240, %v1280
        %v1311 = vsub.f32 %v1243, %v1282
        %v1312 = vsub.f32 %v1245, %v1284
        %v1313 = vsub.f32 %v1248, %v1286
        %v1314 = vsub.f32 %v1250, %v1288
        %v1315 = vsub.f32 %v1253, %v1290
        %v1316 = vsub.f32 %v1255, %v1292
        %v1317 = vsub.f32 %v1258, %v1294
        %v1318 = vsub.f32 %v1260, %v1296
        %v1319 = vsub.f32 %v1263, %v1298
        %v1320 = vsub.f32 %v1265, %v1300
        %v1321 = vsub.f32 %v1268, %v1302
        %v1322 = vsub.f32 %v1270, %v1304
        %v1323 = vsub.f32 %v1273, %v1306
        %v1324 = vsub.f32 %v1275, %v1308
        %v1325 = vmul.f32 %v1309, 1.442695
        %v1326 = vpow.pop %v1325
        %v1327 = vmul.f32 %v1310, 1.442695
        %v1328 = vpow.pop %v1327
        %v1329 = vmul.f32 %v1311, 1.442695
        %v1330 = vpow.pop %v1329
        %v1331 = vmul.f32 %v1312, 1.442695
        %v1332 = vpow.pop %v1331
        %v1333 = vmul.f32 %v1313, 1.442695
        %v1334 = vpow.pop %v1333
        %v1335 = vmul.f32 %v1314, 1.442695
        %v1336 = vpow.pop %v1335
        %v1337 = vmul.f32 %v1315, 1.442695
        %v1338 = vpow.pop %v1337
        %v1339 = vmul.f32 %v1316, 1.442695
        %v1340 = vpow.pop %v1339
        %v1341 = vmul.f32 %v1317, 1.442695
        %v1342 = vpow.pop %v1341
        %v1343 = vmul.f32 %v1318, 1.442695
        %v1344 = vpow.pop %v1343
        %v1345 = vmul.f32 %v1319, 1.442695
        %v1346 = vpow.pop %v1345
        %v1347 = vmul.f32 %v1320, 1.442695
        %v1348 = vpow.pop %v1347
        %v1349 = vmul.f32 %v1321, 1.442695
        %v1350 = vpow.pop %v1349
        %v1351 = vmul.f32 %v1322, 1.442695
        %v1352 = vpow.pop %v1351
        %v1353 = vmul.f32 %v1323, 1.442695
        %v1354 = vpow.pop %v1353
        %v1355 = vmul.f32 %v1324, 1.442695
        %v1356 = vpow.pop %v1355
        %1357 = vadd.xlane.f32.xlu0 %v1326
        %v1358 = vpop.xlane.xlu0 %1357
        %1359 = vadd.xlane.f32.xlu0 %v1328
        %v1360 = vpop.xlane.xlu0 %1359
        %1361 = vadd.xlane.f32.xlu0 %v1330
        %v1362 = vpop.xlane.xlu0 %1361
        %1363 = vadd.xlane.f32.xlu0 %v1332
        %v1364 = vpop.xlane.xlu0 %1363
        %1365 = vadd.xlane.f32.xlu0 %v1334
        %v1366 = vpop.xlane.xlu0 %1365
        %1367 = vadd.xlane.f32.xlu0 %v1336
        %v1368 = vpop.xlane.xlu0 %1367
        %1369 = vadd.xlane.f32.xlu0 %v1338
        %v1370 = vpop.xlane.xlu0 %1369
        %1371 = vadd.xlane.f32.xlu0 %v1340
        %v1372 = vpop.xlane.xlu0 %1371
        %1373 = vadd.xlane.f32.xlu0 %v1342
        %v1374 = vpop.xlane.xlu0 %1373
        %1375 = vadd.xlane.f32.xlu0 %v1344
        %v1376 = vpop.xlane.xlu0 %1375
        %1377 = vadd.xlane.f32.xlu0 %v1346
        %v1378 = vpop.xlane.xlu0 %1377
        %1379 = vadd.xlane.f32.xlu0 %v1348
        %v1380 = vpop.xlane.xlu0 %1379
        %1381 = vadd.xlane.f32.xlu0 %v1350
        %v1382 = vpop.xlane.xlu0 %1381
        %1383 = vadd.xlane.f32.xlu0 %v1352
        %v1384 = vpop.xlane.xlu0 %1383
        %1385 = vadd.xlane.f32.xlu0 %v1354
        %v1386 = vpop.xlane.xlu0 %1385
        %1387 = vadd.xlane.f32.xlu0 %v1356
        %v1388 = vpop.xlane.xlu0 %1387
        %v1389 = vrcp.pop %v1358
        %v1390 = vrcp.pop %v1360
        %v1391 = vrcp.pop %v1362
        %v1392 = vrcp.pop %v1364
        %v1393 = vrcp.pop %v1366
        %v1394 = vrcp.pop %v1368
        %v1395 = vrcp.pop %v1370
        %v1396 = vrcp.pop %v1372
        %v1397 = vrcp.pop %v1374
        %v1398 = vrcp.pop %v1376
        %v1399 = vrcp.pop %v1378
        %v1400 = vrcp.pop %v1380
        %v1401 = vrcp.pop %v1382
        %v1402 = vrcp.pop %v1384
        %v1403 = vrcp.pop %v1386
        %v1404 = vrcp.pop %v1388
        %v1405 = vpack.c.bf16 %v1328, %v1326
        %v1406 = vpack.c.bf16 %v1332, %v1330
        %v1407 = vpack.c.bf16 %v1336, %v1334
        %v1408 = vpack.c.bf16 %v1340, %v1338
        %v1409 = vpack.c.bf16 %v1344, %v1342
        %v1410 = vpack.c.bf16 %v1348, %v1346
        %v1411 = vpack.c.bf16 %v1352, %v1350
        %v1412 = vpack.c.bf16 %v1356, %v1354
        %1413 = vrot.lane.b32.xlu0 %v1059, 96
        %v1414 = vpop.permute.xlu0 %1413
        %1415 = vrot.lane.b32.xlu0 %v1060, 96
        %v1416 = vpop.permute.xlu0 %1415
        %1417 = vrot.lane.b32.xlu0 %v1061, 96
        %v1418 = vpop.permute.xlu0 %1417
        %1419 = vrot.lane.b32.xlu0 %v1062, 96
        %v1420 = vpop.permute.xlu0 %1419
        %1421 = vrot.lane.b32.xlu0 %v1063, 96
        %v1422 = vpop.permute.xlu0 %1421
        %1423 = vrot.lane.b32.xlu0 %v1064, 96
        %v1424 = vpop.permute.xlu0 %1423
        %1425 = vrot.lane.b32.xlu0 %v1065, 96
        %v1426 = vpop.permute.xlu0 %1425
        %1427 = vrot.lane.b32.xlu0 %v1066, 96
        %v1428 = vpop.permute.xlu0 %1427
        %1437 = vmatpush.bf16.msra.mxu0 %v1428
        %1438 = vmatpush.bf16.msra.mxu0 %v1426
        %1439 = vmatpush.bf16.msra.mxu0 %v1424
        %1440 = vmatpush.bf16.msra.mxu0 %v1422
        %1441 = vmatpush.bf16.msra.mxu0 %v1420
        %1442 = vmatpush.bf16.msra.mxu0 %v1418
        %1443 = vmatpush.bf16.msra.mxu0 %v1416
        %1444 = vmatpush.bf16.msra.mxu0 %v1414
        %1445 = vmatmul.bf16.gmra.mxu0 %v1405
        %v1446 = vpop.f32.mrf.mxu0
        %v1447 = vadd.f32 0.0, %v1446
        %v1448 = vpop.f32.mrf.mxu0
        %v1449 = vadd.f32 0.0, %v1448
        %1450 = vmatmul.bf16.gmra.mxu0 %v1406
        %v1451 = vpop.f32.mrf.mxu0
        %v1452 = vadd.f32 0.0, %v1451
        %v1453 = vpop.f32.mrf.mxu0
        %v1454 = vadd.f32 0.0, %v1453
        %1455 = vmatmul.bf16.gmra.mxu0 %v1407
        %v1456 = vpop.f32.mrf.mxu0
        %v1457 = vadd.f32 0.0, %v1456
        %v1458 = vpop.f32.mrf.mxu0
        %v1459 = vadd.f32 0.0, %v1458
        %1460 = vmatmul.bf16.gmra.mxu0 %v1408
        %v1461 = vpop.f32.mrf.mxu0
        %v1462 = vadd.f32 0.0, %v1461
        %v1463 = vpop.f32.mrf.mxu0
        %v1464 = vadd.f32 0.0, %v1463
        %1465 = vmatmul.bf16.gmra.mxu0 %v1409
        %v1466 = vpop.f32.mrf.mxu0
        %v1467 = vadd.f32 0.0, %v1466
        %v1468 = vpop.f32.mrf.mxu0
        %v1469 = vadd.f32 0.0, %v1468
        %1470 = vmatmul.bf16.gmra.mxu0 %v1410
        %v1471 = vpop.f32.mrf.mxu0
        %v1472 = vadd.f32 0.0, %v1471
        %v1473 = vpop.f32.mrf.mxu0
        %v1474 = vadd.f32 0.0, %v1473
        %1475 = vmatmul.bf16.gmra.mxu0 %v1411
        %v1476 = vpop.f32.mrf.mxu0
        %v1477 = vadd.f32 0.0, %v1476
        %v1478 = vpop.f32.mrf.mxu0
        %v1479 = vadd.f32 0.0, %v1478
        %1480 = vmatmul.bf16.gmra.mxu0 %v1412
        %v1481 = vpop.f32.mrf.mxu0
        %v1482 = vadd.f32 0.0, %v1481
        %v1483 = vpop.f32.mrf.mxu0
        %v1484 = vadd.f32 0.0, %v1483
        %1485 = vdwg.mxu0
        %v1486 = vmul.f32 %v1447, %v1389
        %v1487 = vmul.f32 %v1449, %v1390
        %v1488 = vmul.f32 %v1452, %v1391
        %v1489 = vmul.f32 %v1454, %v1392
        %v1490 = vmul.f32 %v1457, %v1393
        %v1491 = vmul.f32 %v1459, %v1394
        %v1492 = vmul.f32 %v1462, %v1395
        %v1493 = vmul.f32 %v1464, %v1396
        %v1494 = vmul.f32 %v1467, %v1397
        %v1495 = vmul.f32 %v1469, %v1398
        %v1496 = vmul.f32 %v1472, %v1399
        %v1497 = vmul.f32 %v1474, %v1400
        %v1498 = vmul.f32 %v1477, %v1401
        %v1499 = vmul.f32 %v1479, %v1402
        %v1500 = vmul.f32 %v1482, %v1403
        %v1501 = vmul.f32 %v1484, %v1404
        %v1502 = vpack.c.bf16 %v1487, %v1486
        %v1503 = vpack.c.bf16 %v1489, %v1488
        %v1504 = vpack.c.bf16 %v1491, %v1490
        %v1505 = vpack.c.bf16 %v1493, %v1492
        %v1506 = vpack.c.bf16 %v1495, %v1494
        %v1507 = vpack.c.bf16 %v1497, %v1496
        %v1508 = vpack.c.bf16 %v1499, %v1498
        %v1509 = vpack.c.bf16 %v1501, %v1500
        %v1514 = vunpack.c.l.b16 %v701
        %v1515 = vunpack.c.l.b16 %v702
        %v1516 = vunpack.c.l.b16 %v703
        %v1517 = vunpack.c.l.b16 %v704
        %v1518 = vpack.c.b16 %v1515, %v1514
        %v1519 = vpack.c.b16 %v1517, %v1516
        %v1523 = vsel %vm793, %v1502, 0
        %v1526 = vsel %vm793, %v1503, 0
        %v1529 = vsel %vm793, %v1504, 0
        %v1532 = vsel %vm793, %v1505, 0
        %v1535 = vsel %vm793, %v1506, 0
        %v1538 = vsel %vm793, %v1507, 0
        %v1541 = vsel %vm793, %v1508, 0
        %v1544 = vsel %vm793, %v1509, 0
        %1546 = vmatpush.bf16.msra.mxu0 0
        %1547 = vmatpush.bf16.msra.mxu0 0
        %1548 = vmatpush.bf16.msra.mxu0 0
        %1549 = vmatpush.bf16.msra.mxu0 0
        %1550 = vmatpush.bf16.msra.mxu0 0
        %1551 = vmatpush.bf16.msra.mxu0 0
        %1552 = vmatpush.bf16.msra.mxu0 %v1519
        %1553 = vmatpush.bf16.msra.mxu0 %v1518
        %1554 = vmatmul.bf16.gmra.mxu0 %v1523
        %v1555 = vpop.f32.mrf.mxu0
        %v1556 = vadd.f32 0.0, %v1555
        %v1557 = vpop.f32.mrf.mxu0
        %v1558 = vadd.f32 0.0, %v1557
        %1559 = vmatmul.bf16.gmra.mxu0 %v1526
        %v1560 = vpop.f32.mrf.mxu0
        %v1561 = vadd.f32 0.0, %v1560
        %v1562 = vpop.f32.mrf.mxu0
        %v1563 = vadd.f32 0.0, %v1562
        %1564 = vmatmul.bf16.gmra.mxu0 %v1529
        %v1565 = vpop.f32.mrf.mxu0
        %v1566 = vadd.f32 0.0, %v1565
        %v1567 = vpop.f32.mrf.mxu0
        %v1568 = vadd.f32 0.0, %v1567
        %1569 = vmatmul.bf16.gmra.mxu0 %v1532
        %v1570 = vpop.f32.mrf.mxu0
        %v1571 = vadd.f32 0.0, %v1570
        %v1572 = vpop.f32.mrf.mxu0
        %v1573 = vadd.f32 0.0, %v1572
        %1574 = vmatmul.bf16.gmra.mxu0 %v1535
        %v1575 = vpop.f32.mrf.mxu0
        %v1576 = vadd.f32 0.0, %v1575
        %v1577 = vpop.f32.mrf.mxu0
        %v1578 = vadd.f32 0.0, %v1577
        %1579 = vmatmul.bf16.gmra.mxu0 %v1538
        %v1580 = vpop.f32.mrf.mxu0
        %v1581 = vadd.f32 0.0, %v1580
        %v1582 = vpop.f32.mrf.mxu0
        %v1583 = vadd.f32 0.0, %v1582
        %1584 = vmatmul.bf16.gmra.mxu0 %v1541
        %v1585 = vpop.f32.mrf.mxu0
        %v1586 = vadd.f32 0.0, %v1585
        %v1587 = vpop.f32.mrf.mxu0
        %v1588 = vadd.f32 0.0, %v1587
        %1589 = vmatmul.bf16.gmra.mxu0 %v1544
        %v1590 = vpop.f32.mrf.mxu0
        %v1591 = vadd.f32 0.0, %v1590
        %v1592 = vpop.f32.mrf.mxu0
        %v1593 = vadd.f32 0.0, %v1592
        %1594 = vdwg.mxu0
        %v1599 = vunpack.c.l.b16 %v697
        %v1600 = vunpack.c.l.b16 %v698
        %v1601 = vunpack.c.l.b16 %v699
        %v1602 = vunpack.c.l.b16 %v700
        %v1603 = vpack.c.b16 %v1600, %v1599
        %v1604 = vpack.c.b16 %v1602, %v1601
        %v1608 = vsel %vm793, %v1140, 0
        %v1611 = vsel %vm793, %v1141, 0
        %v1614 = vsel %vm793, %v1142, 0
        %v1617 = vsel %vm793, %v1143, 0
        %v1620 = vsel %vm793, %v1144, 0
        %v1623 = vsel %vm793, %v1145, 0
        %v1626 = vsel %vm793, %v1146, 0
        %v1629 = vsel %vm793, %v1147, 0
        %1631 = vmatpush.bf16.msra.mxu0 0
        %1632 = vmatpush.bf16.msra.mxu0 0
        %1633 = vmatpush.bf16.msra.mxu0 0
        %1634 = vmatpush.bf16.msra.mxu0 0
        %1635 = vmatpush.bf16.msra.mxu0 0
        %1636 = vmatpush.bf16.msra.mxu0 0
        %1637 = vmatpush.bf16.msra.mxu0 %v1604
        %1638 = vmatpush.bf16.msra.mxu0 %v1603
        %1639 = vmatmul.bf16.gmra.mxu0 %v1608
        %v1640 = vpop.f32.mrf.mxu0
        %v1641 = vadd.f32 %v1556, %v1640
        %v1642 = vpop.f32.mrf.mxu0
        %v1643 = vadd.f32 %v1558, %v1642
        %1644 = vmatmul.bf16.gmra.mxu0 %v1611
        %v1645 = vpop.f32.mrf.mxu0
        %v1646 = vadd.f32 %v1561, %v1645
        %v1647 = vpop.f32.mrf.mxu0
        %v1648 = vadd.f32 %v1563, %v1647
        %1649 = vmatmul.bf16.gmra.mxu0 %v1614
        %v1650 = vpop.f32.mrf.mxu0
        %v1651 = vadd.f32 %v1566, %v1650
        %v1652 = vpop.f32.mrf.mxu0
        %v1653 = vadd.f32 %v1568, %v1652
        %1654 = vmatmul.bf16.gmra.mxu0 %v1617
        %v1655 = vpop.f32.mrf.mxu0
        %v1656 = vadd.f32 %v1571, %v1655
        %v1657 = vpop.f32.mrf.mxu0
        %v1658 = vadd.f32 %v1573, %v1657
        %1659 = vmatmul.bf16.gmra.mxu0 %v1620
        %v1660 = vpop.f32.mrf.mxu0
        %v1661 = vadd.f32 %v1576, %v1660
        %v1662 = vpop.f32.mrf.mxu0
        %v1663 = vadd.f32 %v1578, %v1662
        %1664 = vmatmul.bf16.gmra.mxu0 %v1623
        %v1665 = vpop.f32.mrf.mxu0
        %v1666 = vadd.f32 %v1581, %v1665
        %v1667 = vpop.f32.mrf.mxu0
        %v1668 = vadd.f32 %v1583, %v1667
        %1669 = vmatmul.bf16.gmra.mxu0 %v1626
        %v1670 = vpop.f32.mrf.mxu0
        %v1671 = vadd.f32 %v1586, %v1670
        %v1672 = vpop.f32.mrf.mxu0
        %v1673 = vadd.f32 %v1588, %v1672
        %1674 = vmatmul.bf16.gmra.mxu0 %v1629
        %v1675 = vpop.f32.mrf.mxu0
        %v1676 = vadd.f32 %v1591, %v1675
        %v1677 = vpop.f32.mrf.mxu0
        %v1678 = vadd.f32 %v1593, %v1677
        %1679 = vdwg.mxu0
        %1680 = vrot.lane.b32.xlu0 %v745, 64
        %v1681 = vpop.permute.xlu0 %1680
        %1682 = vrot.lane.b32.xlu0 %v746, 64
        %v1683 = vpop.permute.xlu0 %1682
        %1684 = vrot.lane.b32.xlu0 %v747, 64
        %v1685 = vpop.permute.xlu0 %1684
        %1686 = vrot.lane.b32.xlu0 %v748, 64
        %v1687 = vpop.permute.xlu0 %1686
        %1688 = vrot.lane.b32.xlu0 %v749, 64
        %v1689 = vpop.permute.xlu0 %1688
        %1690 = vrot.lane.b32.xlu0 %v750, 64
        %v1691 = vpop.permute.xlu0 %1690
        %1692 = vrot.lane.b32.xlu0 %v751, 64
        %v1693 = vpop.permute.xlu0 %1692
        %1694 = vrot.lane.b32.xlu0 %v752, 64
        %v1695 = vpop.permute.xlu0 %1694
        %1696 = vrot.lane.b32.xlu0 %v785, 64
        %v1697 = vpop.permute.xlu0 %1696
        %1698 = vrot.lane.b32.xlu0 %v786, 64
        %v1699 = vpop.permute.xlu0 %1698
        %1700 = vrot.lane.b32.xlu0 %v787, 64
        %v1701 = vpop.permute.xlu0 %1700
        %1702 = vrot.lane.b32.xlu0 %v788, 64
        %v1703 = vpop.permute.xlu0 %1702
        %1704 = vrot.lane.b32.xlu0 %v789, 64
        %v1705 = vpop.permute.xlu0 %1704
        %1706 = vrot.lane.b32.xlu0 %v790, 64
        %v1707 = vpop.permute.xlu0 %1706
        %1708 = vrot.lane.b32.xlu0 %v791, 64
        %v1709 = vpop.permute.xlu0 %1708
        %1710 = vrot.lane.b32.xlu0 %v792, 64
        %v1711 = vpop.permute.xlu0 %1710
        %v1713 = vsel %vm793, %v1681, 0
        %v1716 = vsel %vm793, %v1683, 0
        %v1719 = vsel %vm793, %v1685, 0
        %v1722 = vsel %vm793, %v1687, 0
        %v1725 = vsel %vm793, %v1689, 0
        %v1728 = vsel %vm793, %v1691, 0
        %v1731 = vsel %vm793, %v1693, 0
        %v1734 = vsel %vm793, %v1695, 0
        %v1737 = vsel %vm793, %v1697, 0
        %v1740 = vsel %vm793, %v1699, 0
        %v1743 = vsel %vm793, %v1701, 0
        %v1746 = vsel %vm793, %v1703, 0
        %v1749 = vsel %vm793, %v1705, 0
        %v1752 = vsel %vm793, %v1707, 0
        %v1755 = vsel %vm793, %v1709, 0
        %v1758 = vsel %vm793, %v1711, 0
        %1760 = vmatpush.bf16.xpose.msra.mxu0 %v1758
        %1761 = vmatpush.bf16.xpose.msra.mxu0 %v1755
        %1762 = vmatpush.bf16.xpose.msra.mxu0 %v1752
        %1763 = vmatpush.bf16.xpose.msra.mxu0 %v1749
        %1764 = vmatpush.bf16.xpose.msra.mxu0 %v1746
        %1765 = vmatpush.bf16.xpose.msra.mxu0 %v1743
        %1766 = vmatpush.bf16.xpose.msra.mxu0 %v1740
        %1767 = vmatpush.bf16.xpose.msra.mxu0 %v1737
        %1768 = vmatmul.bf16.gmra.mxu0 %v1713
        %v1769 = vpop.f32.mrf.mxu0
        %v1770 = vadd.f32 0.0, %v1769
        %v1771 = vpop.f32.mrf.mxu0
        %v1772 = vadd.f32 0.0, %v1771
        %1773 = vmatmul.bf16.gmra.mxu0 %v1716
        %v1774 = vpop.f32.mrf.mxu0
        %v1775 = vadd.f32 0.0, %v1774
        %v1776 = vpop.f32.mrf.mxu0
        %v1777 = vadd.f32 0.0, %v1776
        %1778 = vmatmul.bf16.gmra.mxu0 %v1719
        %v1779 = vpop.f32.mrf.mxu0
        %v1780 = vadd.f32 0.0, %v1779
        %v1781 = vpop.f32.mrf.mxu0
        %v1782 = vadd.f32 0.0, %v1781
        %1783 = vmatmul.bf16.gmra.mxu0 %v1722
        %v1784 = vpop.f32.mrf.mxu0
        %v1785 = vadd.f32 0.0, %v1784
        %v1786 = vpop.f32.mrf.mxu0
        %v1787 = vadd.f32 0.0, %v1786
        %1788 = vmatmul.bf16.gmra.mxu0 %v1725
        %v1789 = vpop.f32.mrf.mxu0
        %v1790 = vadd.f32 0.0, %v1789
        %v1791 = vpop.f32.mrf.mxu0
        %v1792 = vadd.f32 0.0, %v1791
        %1793 = vmatmul.bf16.gmra.mxu0 %v1728
        %v1794 = vpop.f32.mrf.mxu0
        %v1795 = vadd.f32 0.0, %v1794
        %v1796 = vpop.f32.mrf.mxu0
        %v1797 = vadd.f32 0.0, %v1796
        %1798 = vmatmul.bf16.gmra.mxu0 %v1731
        %v1799 = vpop.f32.mrf.mxu0
        %v1800 = vadd.f32 0.0, %v1799
        %v1801 = vpop.f32.mrf.mxu0
        %v1802 = vadd.f32 0.0, %v1801
        %1803 = vmatmul.bf16.gmra.mxu0 %v1734
        %v1804 = vpop.f32.mrf.mxu0
        %v1805 = vadd.f32 0.0, %v1804
        %v1806 = vpop.f32.mrf.mxu0
        %v1807 = vadd.f32 0.0, %v1806
        %1808 = vdwg.mxu0
        %1809 = vmax.xlane.f32.xlu0 %v1770
        %v1810 = vpop.xlane.xlu0 %1809
        %1811 = vmax.xlane.f32.xlu0 %v1772
        %v1812 = vpop.xlane.xlu0 %1811
        %1813 = vmax.xlane.f32.xlu0 %v1775
        %v1814 = vpop.xlane.xlu0 %1813
        %1815 = vmax.xlane.f32.xlu0 %v1777
        %v1816 = vpop.xlane.xlu0 %1815
        %1817 = vmax.xlane.f32.xlu0 %v1780
        %v1818 = vpop.xlane.xlu0 %1817
        %1819 = vmax.xlane.f32.xlu0 %v1782
        %v1820 = vpop.xlane.xlu0 %1819
        %1821 = vmax.xlane.f32.xlu0 %v1785
        %v1822 = vpop.xlane.xlu0 %1821
        %1823 = vmax.xlane.f32.xlu0 %v1787
        %v1824 = vpop.xlane.xlu0 %1823
        %1825 = vmax.xlane.f32.xlu0 %v1790
        %v1826 = vpop.xlane.xlu0 %1825
        %1827 = vmax.xlane.f32.xlu0 %v1792
        %v1828 = vpop.xlane.xlu0 %1827
        %1829 = vmax.xlane.f32.xlu0 %v1795
        %v1830 = vpop.xlane.xlu0 %1829
        %1831 = vmax.xlane.f32.xlu0 %v1797
        %v1832 = vpop.xlane.xlu0 %1831
        %1833 = vmax.xlane.f32.xlu0 %v1800
        %v1834 = vpop.xlane.xlu0 %1833
        %1835 = vmax.xlane.f32.xlu0 %v1802
        %v1836 = vpop.xlane.xlu0 %1835
        %1837 = vmax.xlane.f32.xlu0 %v1805
        %v1838 = vpop.xlane.xlu0 %1837
        %1839 = vmax.xlane.f32.xlu0 %v1807
        %v1840 = vpop.xlane.xlu0 %1839
        %v1841 = vsub.f32 %v1770, %v1810
        %v1842 = vsub.f32 %v1772, %v1812
        %v1843 = vsub.f32 %v1775, %v1814
        %v1844 = vsub.f32 %v1777, %v1816
        %v1845 = vsub.f32 %v1780, %v1818
        %v1846 = vsub.f32 %v1782, %v1820
        %v1847 = vsub.f32 %v1785, %v1822
        %v1848 = vsub.f32 %v1787, %v1824
        %v1849 = vsub.f32 %v1790, %v1826
        %v1850 = vsub.f32 %v1792, %v1828
        %v1851 = vsub.f32 %v1795, %v1830
        %v1852 = vsub.f32 %v1797, %v1832
        %v1853 = vsub.f32 %v1800, %v1834
        %v1854 = vsub.f32 %v1802, %v1836
        %v1855 = vsub.f32 %v1805, %v1838
        %v1856 = vsub.f32 %v1807, %v1840
        %v1857 = vmul.f32 %v1841, 1.442695
        %v1858 = vpow.pop %v1857
        %v1859 = vmul.f32 %v1842, 1.442695
        %v1860 = vpow.pop %v1859
        %v1861 = vmul.f32 %v1843, 1.442695
        %v1862 = vpow.pop %v1861
        %v1863 = vmul.f32 %v1844, 1.442695
        %v1864 = vpow.pop %v1863
        %v1865 = vmul.f32 %v1845, 1.442695
        %v1866 = vpow.pop %v1865
        %v1867 = vmul.f32 %v1846, 1.442695
        %v1868 = vpow.pop %v1867
        %v1869 = vmul.f32 %v1847, 1.442695
        %v1870 = vpow.pop %v1869
        %v1871 = vmul.f32 %v1848, 1.442695
        %v1872 = vpow.pop %v1871
        %v1873 = vmul.f32 %v1849, 1.442695
        %v1874 = vpow.pop %v1873
        %v1875 = vmul.f32 %v1850, 1.442695
        %v1876 = vpow.pop %v1875
        %v1877 = vmul.f32 %v1851, 1.442695
        %v1878 = vpow.pop %v1877
        %v1879 = vmul.f32 %v1852, 1.442695
        %v1880 = vpow.pop %v1879
        %v1881 = vmul.f32 %v1853, 1.442695
        %v1882 = vpow.pop %v1881
        %v1883 = vmul.f32 %v1854, 1.442695
        %v1884 = vpow.pop %v1883
        %v1885 = vmul.f32 %v1855, 1.442695
        %v1886 = vpow.pop %v1885
        %v1887 = vmul.f32 %v1856, 1.442695
        %v1888 = vpow.pop %v1887
        %1889 = vadd.xlane.f32.xlu0 %v1858
        %v1890 = vpop.xlane.xlu0 %1889
        %1891 = vadd.xlane.f32.xlu0 %v1860
        %v1892 = vpop.xlane.xlu0 %1891
        %1893 = vadd.xlane.f32.xlu0 %v1862
        %v1894 = vpop.xlane.xlu0 %1893
        %1895 = vadd.xlane.f32.xlu0 %v1864
        %v1896 = vpop.xlane.xlu0 %1895
        %1897 = vadd.xlane.f32.xlu0 %v1866
        %v1898 = vpop.xlane.xlu0 %1897
        %1899 = vadd.xlane.f32.xlu0 %v1868
        %v1900 = vpop.xlane.xlu0 %1899
        %1901 = vadd.xlane.f32.xlu0 %v1870
        %v1902 = vpop.xlane.xlu0 %1901
        %1903 = vadd.xlane.f32.xlu0 %v1872
        %v1904 = vpop.xlane.xlu0 %1903
        %1905 = vadd.xlane.f32.xlu0 %v1874
        %v1906 = vpop.xlane.xlu0 %1905
        %1907 = vadd.xlane.f32.xlu0 %v1876
        %v1908 = vpop.xlane.xlu0 %1907
        %1909 = vadd.xlane.f32.xlu0 %v1878
        %v1910 = vpop.xlane.xlu0 %1909
        %1911 = vadd.xlane.f32.xlu0 %v1880
        %v1912 = vpop.xlane.xlu0 %1911
        %1913 = vadd.xlane.f32.xlu0 %v1882
        %v1914 = vpop.xlane.xlu0 %1913
        %1915 = vadd.xlane.f32.xlu0 %v1884
        %v1916 = vpop.xlane.xlu0 %1915
        %1917 = vadd.xlane.f32.xlu0 %v1886
        %v1918 = vpop.xlane.xlu0 %1917
        %1919 = vadd.xlane.f32.xlu0 %v1888
        %v1920 = vpop.xlane.xlu0 %1919
        %v1921 = vrcp.pop %v1890
        %v1922 = vrcp.pop %v1892
        %v1923 = vrcp.pop %v1894
        %v1924 = vrcp.pop %v1896
        %v1925 = vrcp.pop %v1898
        %v1926 = vrcp.pop %v1900
        %v1927 = vrcp.pop %v1902
        %v1928 = vrcp.pop %v1904
        %v1929 = vrcp.pop %v1906
        %v1930 = vrcp.pop %v1908
        %v1931 = vrcp.pop %v1910
        %v1932 = vrcp.pop %v1912
        %v1933 = vrcp.pop %v1914
        %v1934 = vrcp.pop %v1916
        %v1935 = vrcp.pop %v1918
        %v1936 = vrcp.pop %v1920
        %v1937 = vpack.c.bf16 %v1860, %v1858
        %v1938 = vpack.c.bf16 %v1864, %v1862
        %v1939 = vpack.c.bf16 %v1868, %v1866
        %v1940 = vpack.c.bf16 %v1872, %v1870
        %v1941 = vpack.c.bf16 %v1876, %v1874
        %v1942 = vpack.c.bf16 %v1880, %v1878
        %v1943 = vpack.c.bf16 %v1884, %v1882
        %v1944 = vpack.c.bf16 %v1888, %v1886
        %1945 = vrot.lane.b32.xlu0 %v1059, 64
        %v1946 = vpop.permute.xlu0 %1945
        %1947 = vrot.lane.b32.xlu0 %v1060, 64
        %v1948 = vpop.permute.xlu0 %1947
        %1949 = vrot.lane.b32.xlu0 %v1061, 64
        %v1950 = vpop.permute.xlu0 %1949
        %1951 = vrot.lane.b32.xlu0 %v1062, 64
        %v1952 = vpop.permute.xlu0 %1951
        %1953 = vrot.lane.b32.xlu0 %v1063, 64
        %v1954 = vpop.permute.xlu0 %1953
        %1955 = vrot.lane.b32.xlu0 %v1064, 64
        %v1956 = vpop.permute.xlu0 %1955
        %1957 = vrot.lane.b32.xlu0 %v1065, 64
        %v1958 = vpop.permute.xlu0 %1957
        %1959 = vrot.lane.b32.xlu0 %v1066, 64
        %v1960 = vpop.permute.xlu0 %1959
        %1969 = vmatpush.bf16.msra.mxu0 %v1960
        %1970 = vmatpush.bf16.msra.mxu0 %v1958
        %1971 = vmatpush.bf16.msra.mxu0 %v1956
        %1972 = vmatpush.bf16.msra.mxu0 %v1954
        %1973 = vmatpush.bf16.msra.mxu0 %v1952
        %1974 = vmatpush.bf16.msra.mxu0 %v1950
        %1975 = vmatpush.bf16.msra.mxu0 %v1948
        %1976 = vmatpush.bf16.msra.mxu0 %v1946
        %1977 = vmatmul.bf16.gmra.mxu0 %v1937
        %v1978 = vpop.f32.mrf.mxu0
        %v1979 = vadd.f32 0.0, %v1978
        %v1980 = vpop.f32.mrf.mxu0
        %v1981 = vadd.f32 0.0, %v1980
        %1982 = vmatmul.bf16.gmra.mxu0 %v1938
        %v1983 = vpop.f32.mrf.mxu0
        %v1984 = vadd.f32 0.0, %v1983
        %v1985 = vpop.f32.mrf.mxu0
        %v1986 = vadd.f32 0.0, %v1985
        %1987 = vmatmul.bf16.gmra.mxu0 %v1939
        %v1988 = vpop.f32.mrf.mxu0
        %v1989 = vadd.f32 0.0, %v1988
        %v1990 = vpop.f32.mrf.mxu0
        %v1991 = vadd.f32 0.0, %v1990
        %1992 = vmatmul.bf16.gmra.mxu0 %v1940
        %v1993 = vpop.f32.mrf.mxu0
        %v1994 = vadd.f32 0.0, %v1993
        %v1995 = vpop.f32.mrf.mxu0
        %v1996 = vadd.f32 0.0, %v1995
        %1997 = vmatmul.bf16.gmra.mxu0 %v1941
        %v1998 = vpop.f32.mrf.mxu0
        %v1999 = vadd.f32 0.0, %v1998
        %v2000 = vpop.f32.mrf.mxu0
        %v2001 = vadd.f32 0.0, %v2000
        %2002 = vmatmul.bf16.gmra.mxu0 %v1942
        %v2003 = vpop.f32.mrf.mxu0
        %v2004 = vadd.f32 0.0, %v2003
        %v2005 = vpop.f32.mrf.mxu0
        %v2006 = vadd.f32 0.0, %v2005
        %2007 = vmatmul.bf16.gmra.mxu0 %v1943
        %v2008 = vpop.f32.mrf.mxu0
        %v2009 = vadd.f32 0.0, %v2008
        %v2010 = vpop.f32.mrf.mxu0
        %v2011 = vadd.f32 0.0, %v2010
        %2012 = vmatmul.bf16.gmra.mxu0 %v1944
        %v2013 = vpop.f32.mrf.mxu0
        %v2014 = vadd.f32 0.0, %v2013
        %v2015 = vpop.f32.mrf.mxu0
        %v2016 = vadd.f32 0.0, %v2015
        %2017 = vdwg.mxu0
        %v2018 = vmul.f32 %v1979, %v1921
        %v2019 = vmul.f32 %v1981, %v1922
        %v2020 = vmul.f32 %v1984, %v1923
        %v2021 = vmul.f32 %v1986, %v1924
        %v2022 = vmul.f32 %v1989, %v1925
        %v2023 = vmul.f32 %v1991, %v1926
        %v2024 = vmul.f32 %v1994, %v1927
        %v2025 = vmul.f32 %v1996, %v1928
        %v2026 = vmul.f32 %v1999, %v1929
        %v2027 = vmul.f32 %v2001, %v1930
        %v2028 = vmul.f32 %v2004, %v1931
        %v2029 = vmul.f32 %v2006, %v1932
        %v2030 = vmul.f32 %v2009, %v1933
        %v2031 = vmul.f32 %v2011, %v1934
        %v2032 = vmul.f32 %v2014, %v1935
        %v2033 = vmul.f32 %v2016, %v1936
        %v2034 = vpack.c.bf16 %v2019, %v2018
        %v2035 = vpack.c.bf16 %v2021, %v2020
        %v2036 = vpack.c.bf16 %v2023, %v2022
        %v2037 = vpack.c.bf16 %v2025, %v2024
        %v2038 = vpack.c.bf16 %v2027, %v2026
        %v2039 = vpack.c.bf16 %v2029, %v2028
        %v2040 = vpack.c.bf16 %v2031, %v2030
        %v2041 = vpack.c.bf16 %v2033, %v2032
        %v2046 = vunpack.c.l.b16 %v705
        %v2047 = vunpack.c.l.b16 %v706
        %v2048 = vunpack.c.l.b16 %v707
        %v2049 = vunpack.c.l.b16 %v708
        %v2050 = vpack.c.b16 %v2047, %v2046
        %v2051 = vpack.c.b16 %v2049, %v2048
        %v2055 = vsel %vm793, %v2034, 0
        %v2058 = vsel %vm793, %v2035, 0
        %v2061 = vsel %vm793, %v2036, 0
        %v2064 = vsel %vm793, %v2037, 0
        %v2067 = vsel %vm793, %v2038, 0
        %v2070 = vsel %vm793, %v2039, 0
        %v2073 = vsel %vm793, %v2040, 0
        %v2076 = vsel %vm793, %v2041, 0
        %2078 = vmatpush.bf16.msra.mxu0 0
        %2079 = vmatpush.bf16.msra.mxu0 0
        %2080 = vmatpush.bf16.msra.mxu0 0
        %2081 = vmatpush.bf16.msra.mxu0 0
        %2082 = vmatpush.bf16.msra.mxu0 0
        %2083 = vmatpush.bf16.msra.mxu0 0
        %2084 = vmatpush.bf16.msra.mxu0 %v2051
        %2085 = vmatpush.bf16.msra.mxu0 %v2050
        %2086 = vmatmul.bf16.gmra.mxu0 %v2055
        %v2087 = vpop.f32.mrf.mxu0
        %v2088 = vadd.f32 0.0, %v2087
        %v2089 = vpop.f32.mrf.mxu0
        %v2090 = vadd.f32 0.0, %v2089
        %2091 = vmatmul.bf16.gmra.mxu0 %v2058
        %v2092 = vpop.f32.mrf.mxu0
        %v2093 = vadd.f32 0.0, %v2092
        %v2094 = vpop.f32.mrf.mxu0
        %v2095 = vadd.f32 0.0, %v2094
        %2096 = vmatmul.bf16.gmra.mxu0 %v2061
        %v2097 = vpop.f32.mrf.mxu0
        %v2098 = vadd.f32 0.0, %v2097
        %v2099 = vpop.f32.mrf.mxu0
        %v2100 = vadd.f32 0.0, %v2099
        %2101 = vmatmul.bf16.gmra.mxu0 %v2064
        %v2102 = vpop.f32.mrf.mxu0
        %v2103 = vadd.f32 0.0, %v2102
        %v2104 = vpop.f32.mrf.mxu0
        %v2105 = vadd.f32 0.0, %v2104
        %2106 = vmatmul.bf16.gmra.mxu0 %v2067
        %v2107 = vpop.f32.mrf.mxu0
        %v2108 = vadd.f32 0.0, %v2107
        %v2109 = vpop.f32.mrf.mxu0
        %v2110 = vadd.f32 0.0, %v2109
        %2111 = vmatmul.bf16.gmra.mxu0 %v2070
        %v2112 = vpop.f32.mrf.mxu0
        %v2113 = vadd.f32 0.0, %v2112
        %v2114 = vpop.f32.mrf.mxu0
        %v2115 = vadd.f32 0.0, %v2114
        %2116 = vmatmul.bf16.gmra.mxu0 %v2073
        %v2117 = vpop.f32.mrf.mxu0
        %v2118 = vadd.f32 0.0, %v2117
        %v2119 = vpop.f32.mrf.mxu0
        %v2120 = vadd.f32 0.0, %v2119
        %2121 = vmatmul.bf16.gmra.mxu0 %v2076
        %v2122 = vpop.f32.mrf.mxu0
        %v2123 = vadd.f32 0.0, %v2122
        %v2124 = vpop.f32.mrf.mxu0
        %v2125 = vadd.f32 0.0, %v2124
        %2126 = vdwg.mxu0
        %v2127 = vadd.f32 %v1641, %v2088
        %v2128 = vadd.f32 %v1643, %v2090
        %v2129 = vadd.f32 %v1646, %v2093
        %v2130 = vadd.f32 %v1648, %v2095
        %v2131 = vadd.f32 %v1651, %v2098
        %v2132 = vadd.f32 %v1653, %v2100
        %v2133 = vadd.f32 %v1656, %v2103
        %v2134 = vadd.f32 %v1658, %v2105
        %v2135 = vadd.f32 %v1661, %v2108
        %v2136 = vadd.f32 %v1663, %v2110
        %v2137 = vadd.f32 %v1666, %v2113
        %v2138 = vadd.f32 %v1668, %v2115
        %v2139 = vadd.f32 %v1671, %v2118
        %v2140 = vadd.f32 %v1673, %v2120
        %v2141 = vadd.f32 %v1676, %v2123
        %v2142 = vadd.f32 %v1678, %v2125
        %2143 = vrot.lane.b32.xlu0 %v745, 32
        %v2144 = vpop.permute.xlu0 %2143
        %2145 = vrot.lane.b32.xlu0 %v746, 32
        %v2146 = vpop.permute.xlu0 %2145
        %2147 = vrot.lane.b32.xlu0 %v747, 32
        %v2148 = vpop.permute.xlu0 %2147
        %2149 = vrot.lane.b32.xlu0 %v748, 32
        %v2150 = vpop.permute.xlu0 %2149
        %2151 = vrot.lane.b32.xlu0 %v749, 32
        %v2152 = vpop.permute.xlu0 %2151
        %2153 = vrot.lane.b32.xlu0 %v750, 32
        %v2154 = vpop.permute.xlu0 %2153
        %2155 = vrot.lane.b32.xlu0 %v751, 32
        %v2156 = vpop.permute.xlu0 %2155
        %2157 = vrot.lane.b32.xlu0 %v752, 32
        %v2158 = vpop.permute.xlu0 %2157
        %2159 = vrot.lane.b32.xlu0 %v785, 32
        %v2160 = vpop.permute.xlu0 %2159
        %2161 = vrot.lane.b32.xlu0 %v786, 32
        %v2162 = vpop.permute.xlu0 %2161
        %2163 = vrot.lane.b32.xlu0 %v787, 32
        %v2164 = vpop.permute.xlu0 %2163
        %2165 = vrot.lane.b32.xlu0 %v788, 32
        %v2166 = vpop.permute.xlu0 %2165
        %2167 = vrot.lane.b32.xlu0 %v789, 32
        %v2168 = vpop.permute.xlu0 %2167
        %2169 = vrot.lane.b32.xlu0 %v790, 32
        %v2170 = vpop.permute.xlu0 %2169
        %2171 = vrot.lane.b32.xlu0 %v791, 32
        %v2172 = vpop.permute.xlu0 %2171
        %2173 = vrot.lane.b32.xlu0 %v792, 32
        %v2174 = vpop.permute.xlu0 %2173
        %v2176 = vsel %vm793, %v2144, 0
        %v2179 = vsel %vm793, %v2146, 0
        %v2182 = vsel %vm793, %v2148, 0
        %v2185 = vsel %vm793, %v2150, 0
        %v2188 = vsel %vm793, %v2152, 0
        %v2191 = vsel %vm793, %v2154, 0
        %v2194 = vsel %vm793, %v2156, 0
        %v2197 = vsel %vm793, %v2158, 0
        %v2200 = vsel %vm793, %v2160, 0
        %v2203 = vsel %vm793, %v2162, 0
        %v2206 = vsel %vm793, %v2164, 0
        %v2209 = vsel %vm793, %v2166, 0
        %v2212 = vsel %vm793, %v2168, 0
        %v2215 = vsel %vm793, %v2170, 0
        %v2218 = vsel %vm793, %v2172, 0
        %v2221 = vsel %vm793, %v2174, 0
        %2223 = vmatpush.bf16.xpose.msra.mxu0 %v2221
        %2224 = vmatpush.bf16.xpose.msra.mxu0 %v2218
        %2225 = vmatpush.bf16.xpose.msra.mxu0 %v2215
        %2226 = vmatpush.bf16.xpose.msra.mxu0 %v2212
        %2227 = vmatpush.bf16.xpose.msra.mxu0 %v2209
        %2228 = vmatpush.bf16.xpose.msra.mxu0 %v2206
        %2229 = vmatpush.bf16.xpose.msra.mxu0 %v2203
        %2230 = vmatpush.bf16.xpose.msra.mxu0 %v2200
        %2231 = vmatmul.bf16.gmra.mxu0 %v2176
        %v2232 = vpop.f32.mrf.mxu0
        %v2233 = vadd.f32 0.0, %v2232
        %v2234 = vpop.f32.mrf.mxu0
        %v2235 = vadd.f32 0.0, %v2234
        %2236 = vmatmul.bf16.gmra.mxu0 %v2179
        %v2237 = vpop.f32.mrf.mxu0
        %v2238 = vadd.f32 0.0, %v2237
        %v2239 = vpop.f32.mrf.mxu0
        %v2240 = vadd.f32 0.0, %v2239
        %2241 = vmatmul.bf16.gmra.mxu0 %v2182
        %v2242 = vpop.f32.mrf.mxu0
        %v2243 = vadd.f32 0.0, %v2242
        %v2244 = vpop.f32.mrf.mxu0
        %v2245 = vadd.f32 0.0, %v2244
        %2246 = vmatmul.bf16.gmra.mxu0 %v2185
        %v2247 = vpop.f32.mrf.mxu0
        %v2248 = vadd.f32 0.0, %v2247
        %v2249 = vpop.f32.mrf.mxu0
        %v2250 = vadd.f32 0.0, %v2249
        %2251 = vmatmul.bf16.gmra.mxu0 %v2188
        %v2252 = vpop.f32.mrf.mxu0
        %v2253 = vadd.f32 0.0, %v2252
        %v2254 = vpop.f32.mrf.mxu0
        %v2255 = vadd.f32 0.0, %v2254
        %2256 = vmatmul.bf16.gmra.mxu0 %v2191
        %v2257 = vpop.f32.mrf.mxu0
        %v2258 = vadd.f32 0.0, %v2257
        %v2259 = vpop.f32.mrf.mxu0
        %v2260 = vadd.f32 0.0, %v2259
        %2261 = vmatmul.bf16.gmra.mxu0 %v2194
        %v2262 = vpop.f32.mrf.mxu0
        %v2263 = vadd.f32 0.0, %v2262
        %v2264 = vpop.f32.mrf.mxu0
        %v2265 = vadd.f32 0.0, %v2264
        %2266 = vmatmul.bf16.gmra.mxu0 %v2197
        %v2267 = vpop.f32.mrf.mxu0
        %v2268 = vadd.f32 0.0, %v2267
        %v2269 = vpop.f32.mrf.mxu0
        %v2270 = vadd.f32 0.0, %v2269
        %2271 = vdwg.mxu0
        %2272 = vmax.xlane.f32.xlu0 %v2233
        %v2273 = vpop.xlane.xlu0 %2272
        %2274 = vmax.xlane.f32.xlu0 %v2235
        %v2275 = vpop.xlane.xlu0 %2274
        %2276 = vmax.xlane.f32.xlu0 %v2238
        %v2277 = vpop.xlane.xlu0 %2276
        %2278 = vmax.xlane.f32.xlu0 %v2240
        %v2279 = vpop.xlane.xlu0 %2278
        %2280 = vmax.xlane.f32.xlu0 %v2243
        %v2281 = vpop.xlane.xlu0 %2280
        %2282 = vmax.xlane.f32.xlu0 %v2245
        %v2283 = vpop.xlane.xlu0 %2282
        %2284 = vmax.xlane.f32.xlu0 %v2248
        %v2285 = vpop.xlane.xlu0 %2284
        %2286 = vmax.xlane.f32.xlu0 %v2250
        %v2287 = vpop.xlane.xlu0 %2286
        %2288 = vmax.xlane.f32.xlu0 %v2253
        %v2289 = vpop.xlane.xlu0 %2288
        %2290 = vmax.xlane.f32.xlu0 %v2255
        %v2291 = vpop.xlane.xlu0 %2290
        %2292 = vmax.xlane.f32.xlu0 %v2258
        %v2293 = vpop.xlane.xlu0 %2292
        %2294 = vmax.xlane.f32.xlu0 %v2260
        %v2295 = vpop.xlane.xlu0 %2294
        %2296 = vmax.xlane.f32.xlu0 %v2263
        %v2297 = vpop.xlane.xlu0 %2296
        %2298 = vmax.xlane.f32.xlu0 %v2265
        %v2299 = vpop.xlane.xlu0 %2298
        %2300 = vmax.xlane.f32.xlu0 %v2268
        %v2301 = vpop.xlane.xlu0 %2300
        %2302 = vmax.xlane.f32.xlu0 %v2270
        %v2303 = vpop.xlane.xlu0 %2302
        %v2304 = vsub.f32 %v2233, %v2273
        %v2305 = vsub.f32 %v2235, %v2275
        %v2306 = vsub.f32 %v2238, %v2277
        %v2307 = vsub.f32 %v2240, %v2279
        %v2308 = vsub.f32 %v2243, %v2281
        %v2309 = vsub.f32 %v2245, %v2283
        %v2310 = vsub.f32 %v2248, %v2285
        %v2311 = vsub.f32 %v2250, %v2287
        %v2312 = vsub.f32 %v2253, %v2289
        %v2313 = vsub.f32 %v2255, %v2291
        %v2314 = vsub.f32 %v2258, %v2293
        %v2315 = vsub.f32 %v2260, %v2295
        %v2316 = vsub.f32 %v2263, %v2297
        %v2317 = vsub.f32 %v2265, %v2299
        %v2318 = vsub.f32 %v2268, %v2301
        %v2319 = vsub.f32 %v2270, %v2303
        %v2320 = vmul.f32 %v2304, 1.442695
        %v2321 = vpow.pop %v2320
        %v2322 = vmul.f32 %v2305, 1.442695
        %v2323 = vpow.pop %v2322
        %v2324 = vmul.f32 %v2306, 1.442695
        %v2325 = vpow.pop %v2324
        %v2326 = vmul.f32 %v2307, 1.442695
        %v2327 = vpow.pop %v2326
        %v2328 = vmul.f32 %v2308, 1.442695
        %v2329 = vpow.pop %v2328
        %v2330 = vmul.f32 %v2309, 1.442695
        %v2331 = vpow.pop %v2330
        %v2332 = vmul.f32 %v2310, 1.442695
        %v2333 = vpow.pop %v2332
        %v2334 = vmul.f32 %v2311, 1.442695
        %v2335 = vpow.pop %v2334
        %v2336 = vmul.f32 %v2312, 1.442695
        %v2337 = vpow.pop %v2336
        %v2338 = vmul.f32 %v2313, 1.442695
        %v2339 = vpow.pop %v2338
        %v2340 = vmul.f32 %v2314, 1.442695
        %v2341 = vpow.pop %v2340
        %v2342 = vmul.f32 %v2315, 1.442695
        %v2343 = vpow.pop %v2342
        %v2344 = vmul.f32 %v2316, 1.442695
        %v2345 = vpow.pop %v2344
        %v2346 = vmul.f32 %v2317, 1.442695
        %v2347 = vpow.pop %v2346
        %v2348 = vmul.f32 %v2318, 1.442695
        %v2349 = vpow.pop %v2348
        %v2350 = vmul.f32 %v2319, 1.442695
        %v2351 = vpow.pop %v2350
        %2352 = vadd.xlane.f32.xlu0 %v2321
        %v2353 = vpop.xlane.xlu0 %2352
        %2354 = vadd.xlane.f32.xlu0 %v2323
        %v2355 = vpop.xlane.xlu0 %2354
        %2356 = vadd.xlane.f32.xlu0 %v2325
        %v2357 = vpop.xlane.xlu0 %2356
        %2358 = vadd.xlane.f32.xlu0 %v2327
        %v2359 = vpop.xlane.xlu0 %2358
        %2360 = vadd.xlane.f32.xlu0 %v2329
        %v2361 = vpop.xlane.xlu0 %2360
        %2362 = vadd.xlane.f32.xlu0 %v2331
        %v2363 = vpop.xlane.xlu0 %2362
        %2364 = vadd.xlane.f32.xlu0 %v2333
        %v2365 = vpop.xlane.xlu0 %2364
        %2366 = vadd.xlane.f32.xlu0 %v2335
        %v2367 = vpop.xlane.xlu0 %2366
        %2368 = vadd.xlane.f32.xlu0 %v2337
        %v2369 = vpop.xlane.xlu0 %2368
        %2370 = vadd.xlane.f32.xlu0 %v2339
        %v2371 = vpop.xlane.xlu0 %2370
        %2372 = vadd.xlane.f32.xlu0 %v2341
        %v2373 = vpop.xlane.xlu0 %2372
        %2374 = vadd.xlane.f32.xlu0 %v2343
        %v2375 = vpop.xlane.xlu0 %2374
        %2376 = vadd.xlane.f32.xlu0 %v2345
        %v2377 = vpop.xlane.xlu0 %2376
        %2378 = vadd.xlane.f32.xlu0 %v2347
        %v2379 = vpop.xlane.xlu0 %2378
        %2380 = vadd.xlane.f32.xlu0 %v2349
        %v2381 = vpop.xlane.xlu0 %2380
        %2382 = vadd.xlane.f32.xlu0 %v2351
        %v2383 = vpop.xlane.xlu0 %2382
        %v2384 = vrcp.pop %v2353
        %v2385 = vrcp.pop %v2355
        %v2386 = vrcp.pop %v2357
        %v2387 = vrcp.pop %v2359
        %v2388 = vrcp.pop %v2361
        %v2389 = vrcp.pop %v2363
        %v2390 = vrcp.pop %v2365
        %v2391 = vrcp.pop %v2367
        %v2392 = vrcp.pop %v2369
        %v2393 = vrcp.pop %v2371
        %v2394 = vrcp.pop %v2373
        %v2395 = vrcp.pop %v2375
        %v2396 = vrcp.pop %v2377
        %v2397 = vrcp.pop %v2379
        %v2398 = vrcp.pop %v2381
        %v2399 = vrcp.pop %v2383
        %v2400 = vpack.c.bf16 %v2323, %v2321
        %v2401 = vpack.c.bf16 %v2327, %v2325
        %v2402 = vpack.c.bf16 %v2331, %v2329
        %v2403 = vpack.c.bf16 %v2335, %v2333
        %v2404 = vpack.c.bf16 %v2339, %v2337
        %v2405 = vpack.c.bf16 %v2343, %v2341
        %v2406 = vpack.c.bf16 %v2347, %v2345
        %v2407 = vpack.c.bf16 %v2351, %v2349
        %2408 = vrot.lane.b32.xlu0 %v1059, 32
        %v2409 = vpop.permute.xlu0 %2408
        %2410 = vrot.lane.b32.xlu0 %v1060, 32
        %v2411 = vpop.permute.xlu0 %2410
        %2412 = vrot.lane.b32.xlu0 %v1061, 32
        %v2413 = vpop.permute.xlu0 %2412
        %2414 = vrot.lane.b32.xlu0 %v1062, 32
        %v2415 = vpop.permute.xlu0 %2414
        %2416 = vrot.lane.b32.xlu0 %v1063, 32
        %v2417 = vpop.permute.xlu0 %2416
        %2418 = vrot.lane.b32.xlu0 %v1064, 32
        %v2419 = vpop.permute.xlu0 %2418
        %2420 = vrot.lane.b32.xlu0 %v1065, 32
        %v2421 = vpop.permute.xlu0 %2420
        %2422 = vrot.lane.b32.xlu0 %v1066, 32
        %v2423 = vpop.permute.xlu0 %2422
        %2432 = vmatpush.bf16.msra.mxu0 %v2423
        %2433 = vmatpush.bf16.msra.mxu0 %v2421
        %2434 = vmatpush.bf16.msra.mxu0 %v2419
        %2435 = vmatpush.bf16.msra.mxu0 %v2417
        %2436 = vmatpush.bf16.msra.mxu0 %v2415
        %2437 = vmatpush.bf16.msra.mxu0 %v2413
        %2438 = vmatpush.bf16.msra.mxu0 %v2411
        %2439 = vmatpush.bf16.msra.mxu0 %v2409
        %2440 = vmatmul.bf16.gmra.mxu0 %v2400
        %v2441 = vpop.f32.mrf.mxu0
        %v2442 = vadd.f32 0.0, %v2441
        %v2443 = vpop.f32.mrf.mxu0
        %v2444 = vadd.f32 0.0, %v2443
        %2445 = vmatmul.bf16.gmra.mxu0 %v2401
        %v2446 = vpop.f32.mrf.mxu0
        %v2447 = vadd.f32 0.0, %v2446
        %v2448 = vpop.f32.mrf.mxu0
        %v2449 = vadd.f32 0.0, %v2448
        %2450 = vmatmul.bf16.gmra.mxu0 %v2402
        %v2451 = vpop.f32.mrf.mxu0
        %v2452 = vadd.f32 0.0, %v2451
        %v2453 = vpop.f32.mrf.mxu0
        %v2454 = vadd.f32 0.0, %v2453
        %2455 = vmatmul.bf16.gmra.mxu0 %v2403
        %v2456 = vpop.f32.mrf.mxu0
        %v2457 = vadd.f32 0.0, %v2456
        %v2458 = vpop.f32.mrf.mxu0
        %v2459 = vadd.f32 0.0, %v2458
        %2460 = vmatmul.bf16.gmra.mxu0 %v2404
        %v2461 = vpop.f32.mrf.mxu0
        %v2462 = vadd.f32 0.0, %v2461
        %v2463 = vpop.f32.mrf.mxu0
        %v2464 = vadd.f32 0.0, %v2463
        %2465 = vmatmul.bf16.gmra.mxu0 %v2405
        %v2466 = vpop.f32.mrf.mxu0
        %v2467 = vadd.f32 0.0, %v2466
        %v2468 = vpop.f32.mrf.mxu0
        %v2469 = vadd.f32 0.0, %v2468
        %2470 = vmatmul.bf16.gmra.mxu0 %v2406
        %v2471 = vpop.f32.mrf.mxu0
        %v2472 = vadd.f32 0.0, %v2471
        %v2473 = vpop.f32.mrf.mxu0
        %v2474 = vadd.f32 0.0, %v2473
        %2475 = vmatmul.bf16.gmra.mxu0 %v2407
        %v2476 = vpop.f32.mrf.mxu0
        %v2477 = vadd.f32 0.0, %v2476
        %v2478 = vpop.f32.mrf.mxu0
        %v2479 = vadd.f32 0.0, %v2478
        %2480 = vdwg.mxu0
        %v2481 = vmul.f32 %v2442, %v2384
        %v2482 = vmul.f32 %v2444, %v2385
        %v2483 = vmul.f32 %v2447, %v2386
        %v2484 = vmul.f32 %v2449, %v2387
        %v2485 = vmul.f32 %v2452, %v2388
        %v2486 = vmul.f32 %v2454, %v2389
        %v2487 = vmul.f32 %v2457, %v2390
        %v2488 = vmul.f32 %v2459, %v2391
        %v2489 = vmul.f32 %v2462, %v2392
        %v2490 = vmul.f32 %v2464, %v2393
        %v2491 = vmul.f32 %v2467, %v2394
        %v2492 = vmul.f32 %v2469, %v2395
        %v2493 = vmul.f32 %v2472, %v2396
        %v2494 = vmul.f32 %v2474, %v2397
        %v2495 = vmul.f32 %v2477, %v2398
        %v2496 = vmul.f32 %v2479, %v2399
        %v2497 = vpack.c.bf16 %v2482, %v2481
        %v2498 = vpack.c.bf16 %v2484, %v2483
        %v2499 = vpack.c.bf16 %v2486, %v2485
        %v2500 = vpack.c.bf16 %v2488, %v2487
        %v2501 = vpack.c.bf16 %v2490, %v2489
        %v2502 = vpack.c.bf16 %v2492, %v2491
        %v2503 = vpack.c.bf16 %v2494, %v2493
        %v2504 = vpack.c.bf16 %v2496, %v2495
        %v2509 = vunpack.c.l.b16 %v709
        %v2510 = vunpack.c.l.b16 %v710
        %v2511 = vunpack.c.l.b16 %v711
        %v2512 = vunpack.c.l.b16 %v712
        %v2513 = vpack.c.b16 %v2510, %v2509
        %v2514 = vpack.c.b16 %v2512, %v2511
        %v2518 = vsel %vm793, %v2497, 0
        %v2521 = vsel %vm793, %v2498, 0
        %v2524 = vsel %vm793, %v2499, 0
        %v2527 = vsel %vm793, %v2500, 0
        %v2530 = vsel %vm793, %v2501, 0
        %v2533 = vsel %vm793, %v2502, 0
        %v2536 = vsel %vm793, %v2503, 0
        %v2539 = vsel %vm793, %v2504, 0
        %2541 = vmatpush.bf16.msra.mxu0 0
        %2542 = vmatpush.bf16.msra.mxu0 0
        %2543 = vmatpush.bf16.msra.mxu0 0
        %2544 = vmatpush.bf16.msra.mxu0 0
        %2545 = vmatpush.bf16.msra.mxu0 0
        %2546 = vmatpush.bf16.msra.mxu0 0
        %2547 = vmatpush.bf16.msra.mxu0 %v2514
        %2548 = vmatpush.bf16.msra.mxu0 %v2513
        %2549 = vmatmul.bf16.gmra.mxu0 %v2518
        %v2550 = vpop.f32.mrf.mxu0
        %v2551 = vadd.f32 0.0, %v2550
        %v2552 = vpop.f32.mrf.mxu0
        %v2553 = vadd.f32 0.0, %v2552
        %2554 = vmatmul.bf16.gmra.mxu0 %v2521
        %v2555 = vpop.f32.mrf.mxu0
        %v2556 = vadd.f32 0.0, %v2555
        %v2557 = vpop.f32.mrf.mxu0
        %v2558 = vadd.f32 0.0, %v2557
        %2559 = vmatmul.bf16.gmra.mxu0 %v2524
        %v2560 = vpop.f32.mrf.mxu0
        %v2561 = vadd.f32 0.0, %v2560
        %v2562 = vpop.f32.mrf.mxu0
        %v2563 = vadd.f32 0.0, %v2562
        %2564 = vmatmul.bf16.gmra.mxu0 %v2527
        %v2565 = vpop.f32.mrf.mxu0
        %v2566 = vadd.f32 0.0, %v2565
        %v2567 = vpop.f32.mrf.mxu0
        %v2568 = vadd.f32 0.0, %v2567
        %2569 = vmatmul.bf16.gmra.mxu0 %v2530
        %v2570 = vpop.f32.mrf.mxu0
        %v2571 = vadd.f32 0.0, %v2570
        %v2572 = vpop.f32.mrf.mxu0
        %v2573 = vadd.f32 0.0, %v2572
        %2574 = vmatmul.bf16.gmra.mxu0 %v2533
        %v2575 = vpop.f32.mrf.mxu0
        %v2576 = vadd.f32 0.0, %v2575
        %v2577 = vpop.f32.mrf.mxu0
        %v2578 = vadd.f32 0.0, %v2577
        %2579 = vmatmul.bf16.gmra.mxu0 %v2536
        %v2580 = vpop.f32.mrf.mxu0
        %v2581 = vadd.f32 0.0, %v2580
        %v2582 = vpop.f32.mrf.mxu0
        %v2583 = vadd.f32 0.0, %v2582
        %2584 = vmatmul.bf16.gmra.mxu0 %v2539
        %v2585 = vpop.f32.mrf.mxu0
        %v2586 = vadd.f32 0.0, %v2585
        %v2587 = vpop.f32.mrf.mxu0
        %v2588 = vadd.f32 0.0, %v2587
        %2589 = vdwg.mxu0
        %v2590 = vadd.f32 %v2127, %v2551
        %v2591 = vadd.f32 %v2128, %v2553
        %v2592 = vadd.f32 %v2129, %v2556
        %v2593 = vadd.f32 %v2130, %v2558
        %v2594 = vadd.f32 %v2131, %v2561
        %v2595 = vadd.f32 %v2132, %v2563
        %v2596 = vadd.f32 %v2133, %v2566
        %v2597 = vadd.f32 %v2134, %v2568
        %v2598 = vadd.f32 %v2135, %v2571
        %v2599 = vadd.f32 %v2136, %v2573
        %v2600 = vadd.f32 %v2137, %v2576
        %v2601 = vadd.f32 %v2138, %v2578
        %v2602 = vadd.f32 %v2139, %v2581
        %v2603 = vadd.f32 %v2140, %v2583
        %v2604 = vadd.f32 %v2141, %v2586
        %v2605 = vadd.f32 %v2142, %v2588
        %v2606 = vld [vmem:[%s4] sm:$0x1]
        %v2608 = vperm.slane %v2606, 0
        %v2610 = vadd.f32 %v2590, %v2608
        %v2611 = vadd.f32 %v2591, %v2608
        %v2612 = vadd.f32 %v2592, %v2608
        %v2613 = vadd.f32 %v2593, %v2608
        %v2614 = vadd.f32 %v2594, %v2608
        %v2615 = vadd.f32 %v2595, %v2608
        %v2616 = vadd.f32 %v2596, %v2608
        %v2617 = vadd.f32 %v2597, %v2608
        %v2618 = vadd.f32 %v2598, %v2608
        %v2619 = vadd.f32 %v2599, %v2608
        %v2620 = vadd.f32 %v2600, %v2608
        %v2621 = vadd.f32 %v2601, %v2608
        %v2622 = vadd.f32 %v2602, %v2608
        %v2623 = vadd.f32 %v2603, %v2608
        %v2624 = vadd.f32 %v2604, %v2608
        %v2625 = vadd.f32 %v2605, %v2608
        %2626 = vst [vmem:[%s292] sm:$0xff] %v2610
        %2627 = vst [vmem:[%s292 + $0x8] sm:$0xff] %v2611
        %2628 = vst [vmem:[%s292 + $0x10] sm:$0xff] %v2612
        %2629 = vst [vmem:[%s292 + $0x18] sm:$0xff] %v2613
        %2630 = vst [vmem:[%s292 + $0x20] sm:$0xff] %v2614
        %2631 = vst [vmem:[%s292 + $0x28] sm:$0xff] %v2615
        %2632 = vst [vmem:[%s292 + $0x30] sm:$0xff] %v2616
        %2633 = vst [vmem:[%s292 + $0x38] sm:$0xff] %v2617
        %2634 = vst [vmem:[%s292 + $0x40] sm:$0xff] %v2618
        %2635 = vst [vmem:[%s292 + $0x48] sm:$0xff] %v2619
        %2636 = vst [vmem:[%s292 + $0x50] sm:$0xff] %v2620
        %2637 = vst [vmem:[%s292 + $0x58] sm:$0xff] %v2621
        %2638 = vst [vmem:[%s292 + $0x60] sm:$0xff] %v2622
        %2639 = vst [vmem:[%s292 + $0x68] sm:$0xff] %v2623
        %2640 = vst [vmem:[%s292 + $0x70] sm:$0xff] %v2624
        %2641 = vst [vmem:[%s292 + $0x78] sm:$0xff] %v2625
        %s2642 = sand.u32 %s142, 1
        %s2643 = scalar_lea.sflag [#allocation4], %s2642
        %s2644 = sand.u32 %s142, 1
        %s2645 = smul.addr %s2644, 128
        %s2646 = scalar_lea.vmem [#allocation10], %s2645
        // Predicated region
        $region57: #{tpu_custom_call.1} parent=39 // pred_check
          %p2647 = pneg %p152
        $region58: #{tpu_custom_call.1} parent=39 // pred_check_branch
          %2649 = sbr.rel (%p2647) target = $region60
        $region59: #{tpu_custom_call.1} parent=39 // pred_region
          %2651 = vsyncadd %s2643, 0
          %s2652 = smul.addr %s24, 16
          %s2653 = smul.addr %s2652, 8
          %s2654 = scalar_lea.hbm %s5, %s2653
          %s2655 = sshll.u32 %s2646, 4
          %s2656 = int_to_ptr.vmem [resolvable:$true] %s2655
          %s2657 = sshll.u32 %s2654, 4
          %s2658 = int_to_ptr.hbm [resolvable:$true] %s2657
          %2663 = dma.vmem_to_hbm [thread:$0]  %s2656, 2048, %s2658, %s2643, 128, 128, 8
        $region60: #{tpu_custom_call.1} parent=39 // pred_fallthru
          _
      $region40: #{tpu_custom_call.1} parent=5 // pred_fallthru
        _
      %p2664 = scmp.le.s32.totalorder 2, %s19
      // Predicated region
      $region61: #{tpu_custom_call.1} parent=5 // pred_check
        %p2665 = pneg %p2664
      $region62: #{tpu_custom_call.1} parent=5 // pred_check_branch
        %2667 = sbr.rel (%p2665) target = $region64
      $region63: #{tpu_custom_call.1} parent=5 // pred_region
        %s2668 = ssub.s32 %s19, 2
        // Predicated region
        $region65: #{tpu_custom_call.1} parent=63 // pred_check
          %p2669 = pneg %p158
        $region66: #{tpu_custom_call.1} parent=63 // pred_check_branch
          %2671 = sbr.rel (%p2669) target = $region68
        $region67: #{tpu_custom_call.1} parent=63 // pred_region
          %s2672 = sand.u32 %s143, 1
          %s2673 = scalar_lea.sflag [#allocation4], %s2672
          %s2674 = sand.u32 %s143, 1
          %s2675 = smul.addr %s2674, 128
          %s2676 = scalar_lea.vmem [#allocation10], %s2675
          %2678 = dma.done %s2673, 2048
        $region68: #{tpu_custom_call.1} parent=63 // pred_fallthru
          _
      $region64: #{tpu_custom_call.1} parent=5 // pred_fallthru
        _
    $region6: #{tpu_custom_call.1} parent=1 // loop_footer
      %s23 = sadd.s32 1, %s19
    $region7: #{tpu_custom_call.1} parent=1 // loop_footer_branch
      %18 = sbr.rel target = $region3
    $region8: #{tpu_custom_call.1} parent=1 // loop_exit
      _
    %2679 = vsyncpa [#allocation3], 1
    %s2680 = scalar_lea.sflag [#allocation3], 1
    %2681 = vsyncpa %s2680, 1
    %2682 = vsyncpa [#allocation6], 1
    %2683 = vsyncpa [#allocation9], 1
    %2684 = vsyncpa [#allocation4], 1
    %s2685 = scalar_lea.sflag [#allocation4], 1
    %2686 = vsyncpa %s2685, 1

</llo_original>
